<compile_context>
chip_gen: v7x
topology: tpu7x:2x2x1
jax: 0.10.0
libtpu: 0.0.40
codegen_flags: <defaults>
</compile_context>

<pallas_src>
import math
import numpy as np
import jax
import jax.numpy as jnp
from jax.experimental import pallas as pl
from jax.experimental.pallas import tpu as pltpu


# ----------------------------- Pallas kernel -------------------------------

def _make_kernel(num_heads: int, head_dim: int, d_model: int, eps: float = 1e-5):
    C = d_model
    half = head_dim // 2
    inv_sqrt_d = 1.0 / math.sqrt(head_dim)
    f32 = jnp.float32

    def layernorm(z, gamma, beta):
        mu = jnp.mean(z, axis=-1, keepdims=True)
        var = jnp.mean((z - mu) ** 2, axis=-1, keepdims=True)
        return (z - mu) * jax.lax.rsqrt(var + eps) * gamma + beta

    def kernel(x_ref, mem_ref, trig_ref, w_attn_ref, w_ffn_ref, vecs_ref,
               out_ref, scores_ref):
        x = x_ref[...]        # (N, C)
        mem = mem_ref[...]    # (M, C)
        cos3 = trig_ref[0]    # (H, M, dh)   per-head split-half cos table
        sin3 = trig_ref[1]    # (H, M, dh)   sign-folded sin table (-sin | +sin)

        def vrow(i, width=C):                 # packed bias / gamma / beta rows
            return vecs_ref[i:i + 1, 0:width]  # (1, width)

        bq, bk, bv, bo = vrow(0), vrow(1), vrow(2), vrow(3)
        g1, b1 = vrow(4), vrow(5)
        bs, g2, b2 = vrow(6), vrow(7), vrow(8)
        be = vrow(9, 2 * C)

        # Projections (Wq/Wk columns are pre-permuted to split-half layout).
        q = jnp.dot(x, w_attn_ref[0], preferred_element_type=f32) + bq
        k = jnp.dot(mem, w_attn_ref[1], preferred_element_type=f32) + bk
        v = jnp.dot(mem, w_attn_ref[2], preferred_element_type=f32) + bv

        def heads(t):                         # (T, C) -> (H, T, dh)
            return jnp.stack(
                [t[:, h * head_dim:(h + 1) * head_dim] for h in range(num_heads)],
                axis=0)

        q3, k3, v3 = heads(q), heads(k), heads(v)

        # RoPE in split-half layout: rotate-half == swap the two head halves;
        # the sign lives in sin3, so no permutation matmul and no negation op.
        def rope(t3):
            rot = jnp.concatenate([t3[..., half:], t3[..., :half]], axis=-1)
            return t3 * cos3 + rot * sin3

        q3 = rope(q3)
        k3 = rope(k3)

        # Head-batched scaled dot-product attention (one MXU contraction each).
        s = jnp.einsum('hnd,hmd->hnm', q3, k3,
                       preferred_element_type=f32) * inv_sqrt_d        # (H,N,M)
        s_max = jnp.max(s, axis=-1, keepdims=True)
        p = jnp.exp(s - s_max)
        attn = p * pl.reciprocal(jnp.sum(p, axis=-1, keepdims=True), approx=True)
        scores_ref[0] = attn                                           # one store

        ctx = jnp.einsum('hnm,hmd->hnd', attn, v3,
                         preferred_element_type=f32)                   # (H,N,dh)
        hidden = jnp.concatenate([ctx[h] for h in range(num_heads)], axis=-1)

        # Attention output linear + residual + LayerNorm
        attn_out = jnp.dot(hidden, w_attn_ref[3], preferred_element_type=f32) + bo
        norm1 = layernorm(attn_out + x, g1, b1)

        # FFN expand -> ReLU -> squeeze (ws stored transposed -> A @ B^T form)
        h1 = jnp.maximum(
            jnp.dot(norm1, w_ffn_ref[0], preferred_element_type=f32) + be, 0.0)
        h2 = jax.lax.dot_general(h1, w_ffn_ref[1], (((1,), (1,)), ((), ())),
                                 preferred_element_type=f32) + bs
        out_ref[0] = layernorm(norm1 + h2, g2, b2)

    return kernel


# ------------------------------- wrapper ------------------------------------

def rpe_transformer_layer(input_states, memory_states, position_states,
                          params, num_heads):
    """Fused Pallas forward of RPETransformerLayer (k=None, dropout=None)."""
    B, N, C = input_states.shape
    _, M, _ = memory_states.shape
    assert B == 1 and N == M and C % num_heads == 0
    dh = C // num_heads
    assert dh % 2 == 0
    half = dh // 2
    assert position_states.shape == (1, M, C // 2)
    f32 = jnp.float32

    # --- glue: theta (nearest-x2 interp) -> per-head split-half cos / signed sin
    theta = position_states[0].reshape(M, num_heads, half)          # (M, H, dh/2)
    theta = jnp.transpose(theta, (1, 0, 2)).astype(f32)             # (H, M, dh/2)
    cos3 = jnp.concatenate([jnp.cos(theta), jnp.cos(theta)], axis=-1)   # (H,M,dh)
    sin3 = jnp.concatenate([-jnp.sin(theta), jnp.sin(theta)], axis=-1)  # sign fold
    trig = jnp.stack([cos3, sin3]).astype(f32)                      # (2, H, M, dh)

    # --- glue: per-head split-half channel permutation folded into Wq/Wk/bq/bk
    perm_head = np.concatenate([np.arange(0, dh, 2), np.arange(1, dh, 2)])
    perm = (np.arange(num_heads)[:, None] * dh + perm_head[None, :]).reshape(-1)
    wq_s, bq_s = params["wq"][:, perm], params["bq"][:, perm]
    wk_s, bk_s = params["wk"][:, perm], params["bk"][:, perm]

    # --- pack weights & small vectors (21 inputs -> 6) ------------------------
    w_attn = jnp.stack([wq_s, wk_s, params["wv"], params["wo"]]).astype(f32)
    w_ffn = jnp.stack([params["we"], params["ws"].T]).astype(f32)   # (2, C, 2C)
    zpad = jnp.zeros((1, C), f32)
    rows = [bq_s, bk_s, params["bv"], params["bo"], params["g1"], params["b1"],
            params["bs"], params["g2"], params["b2"]]
    vecs = jnp.concatenate(
        [jnp.concatenate([r.astype(f32), zpad], axis=-1) for r in rows]
        + [params["be"].astype(f32)], axis=0)                       # (10, 2C)

    x2 = input_states[0].astype(f32)
    mem2 = memory_states[0].astype(f32)

    flops = (4 * N * C * C + 4 * M * C * C            # q,k,v,o projections
             + 4 * num_heads * N * M * dh             # qk^T and attn@v
             + 8 * N * C * C)                         # FFN C->2C->C
    bytes_accessed = 4 * (x2.size + mem2.size + trig.size + w_attn.size
                          + w_ffn.size + vecs.size + N * C + num_heads * N * M)

    kernel = _make_kernel(num_heads, dh, C)
    vmem = lambda: pl.BlockSpec(memory_space=pltpu.MemorySpace.VMEM)

    out_states, attn_scores = pl.pallas_call(
        kernel,
        out_shape=(jax.ShapeDtypeStruct((1, N, C), f32),
                   jax.ShapeDtypeStruct((1, num_heads, N, M), f32)),
        in_specs=[vmem() for _ in range(6)],
        out_specs=(vmem(), vmem()),
        cost_estimate=pl.CostEstimate(flops=flops,
                                      transcendentals=num_heads * N * M,
                                      bytes_accessed=bytes_accessed),
    )(x2, mem2, trig, w_attn, w_ffn, vecs)
    return out_states, attn_scores


# ------------------------- pure-JAX reference ------------------------------

def reference(input_states, memory_states, position_states, params, num_heads):
    B, N, C = input_states.shape
    M = memory_states.shape[1]
    dh = C // num_heads

    def lin(t, w, b):
        return t @ w + b

    q = lin(input_states, params["wq"], params["bq"])
    k = lin(memory_states, params["wk"], params["bk"])
    v = lin(memory_states, params["wv"], params["bv"])

    def split(t):
        return t.reshape(B, -1, num_heads, dh).transpose(0, 2, 1, 3)

    q, k, v = split(q), split(k), split(v)                       # (1,H,*,dh)
    pos_r = position_states.reshape(B, M, num_heads, dh // 2).transpose(0, 2, 1, 3)
    theta = jnp.repeat(pos_r, 2, axis=-1)                        # (1,H,M,dh)

    def rope(d):
        dp = d.reshape(d.shape[:-1] + (dh // 2, 2))
        drot = jnp.stack([-dp[..., 1], dp[..., 0]], axis=-1).reshape(d.shape)
        return d * jnp.cos(theta) + drot * jnp.sin(theta)

    q, k = rope(q), rope(k)
    s = jnp.einsum('bhnd,bhmd->bhnm', q, k) / math.sqrt(dh)
    attn = jax.nn.softmax(s, axis=-1)
    hid = jnp.einsum('bhnm,bhmd->bhnd', attn, v)
    hid = hid.transpose(0, 2, 1, 3).reshape(B, N, C)
    hid = lin(hid, params["wo"], params["bo"])

    def ln(z, g, b):
        mu = z.mean(-1, keepdims=True)
        var = ((z - mu) ** 2).mean(-1, keepdims=True)
        return (z - mu) / jnp.sqrt(var + 1e-5) * g + b

    n1 = ln(hid + input_states, params["g1"], params["b1"])
    h1 = jax.nn.relu(lin(n1, params["we"], params["be"]))
    h2 = lin(h1, params["ws"], params["bs"])
    out = ln(n1 + h2, params["g2"], params["b2"])
    return out, attn


# ------------------------------- main ---------------------------------------

if __name__ == "__main__":
    B, N, C, H = 1, 16, 32, 4          # d_model=32, num_heads=4, head_dim=8
    M = N
    key = jax.random.PRNGKey(0)
    ks = jax.random.split(key, 16)

    def w(k_, shape, scale=0.1):
        return (scale * jax.random.normal(k_, shape)).astype(jnp.float32)

    params = {
        "wq": w(ks[0], (C, C)), "bq": w(ks[1], (1, C)),
        "wk": w(ks[2], (C, C)), "bk": w(ks[3], (1, C)),
        "wv": w(ks[4], (C, C)), "bv": w(ks[5], (1, C)),
        "wo": w(ks[6], (C, C)), "bo": w(ks[7], (1, C)),
        "g1": jnp.ones((1, C), jnp.float32), "b1": jnp.zeros((1, C), jnp.float32),
        "we": w(ks[8], (C, 2 * C)), "be": w(ks[9], (1, 2 * C)),
        "ws": w(ks[10], (2 * C, C)), "bs": w(ks[11], (1, C)),
        "g2": jnp.ones((1, C), jnp.float32), "b2": jnp.zeros((1, C), jnp.float32),
    }

    input_states = jax.random.normal(ks[12], (B, N, C), jnp.float32)
    memory_states = jax.random.normal(ks[13], (B, M, C), jnp.float32)
    position_states = jax.random.normal(ks[14], (B, M, C // 2), jnp.float32)

    out, scores = rpe_transformer_layer(
        input_states, memory_states, position_states, params, H)
    out = jax.block_until_ready(out)
    scores = jax.block_until_ready(scores)

    ref_out, ref_scores = reference(
        input_states, memory_states, position_states, params, H)

    assert out.shape == (B, N, C) and scores.shape == (B, H, N, M)
    assert jnp.allclose(out, ref_out, atol=2e-3, rtol=2e-3), "output mismatch"
    assert jnp.allclose(scores, ref_scores, atol=2e-3, rtol=2e-3), "scores mismatch"

    print("KERNEL_OK")
</pallas_src>

<mosaic_0001>
module attributes {stable_mosaic.version = 11 : i64} {
  func.func @kernel(%arg0: memref<16x32xf32, #tpu.memory_space<vmem>>, %arg1: memref<16x32xf32, #tpu.memory_space<vmem>>, %arg2: memref<2x4x16x8xf32, #tpu.memory_space<vmem>>, %arg3: memref<4x32x32xf32, #tpu.memory_space<vmem>>, %arg4: memref<2x32x64xf32, #tpu.memory_space<vmem>>, %arg5: memref<10x64xf32, #tpu.memory_space<vmem>>, %arg6: memref<1x16x32xf32, #tpu.memory_space<vmem>>, %arg7: memref<1x4x16x16xf32, #tpu.memory_space<vmem>>) attributes {dimension_semantics = [], scalar_prefetch = 0 : i64, scratch_operands = 0 : i64, tpu.core_type = #tpu.core_type<tc>} {
    %c0 = arith.constant 0 : index
    %c0_0 = arith.constant 0 : index
    %0 = vector.load %arg0[%c0, %c0_0] : memref<16x32xf32, #tpu.memory_space<vmem>>, vector<16x32xf32>
    %c0_1 = arith.constant 0 : index
    %c0_2 = arith.constant 0 : index
    %1 = vector.load %arg1[%c0_1, %c0_2] : memref<16x32xf32, #tpu.memory_space<vmem>>, vector<16x32xf32>
    %c0_3 = arith.constant 0 : index
    %c0_4 = arith.constant 0 : index
    %c0_5 = arith.constant 0 : index
    %c0_6 = arith.constant 0 : index
    %2 = vector.load %arg2[%c0_3, %c0_4, %c0_5, %c0_6] : memref<2x4x16x8xf32, #tpu.memory_space<vmem>>, vector<1x4x16x8xf32>
    %3 = vector.shape_cast %2 : vector<1x4x16x8xf32> to vector<4x16x8xf32>
    %c1 = arith.constant 1 : index
    %c0_7 = arith.constant 0 : index
    %c0_8 = arith.constant 0 : index
    %c0_9 = arith.constant 0 : index
    %4 = vector.load %arg2[%c1, %c0_7, %c0_8, %c0_9] : memref<2x4x16x8xf32, #tpu.memory_space<vmem>>, vector<1x4x16x8xf32>
    %5 = vector.shape_cast %4 : vector<1x4x16x8xf32> to vector<4x16x8xf32>
    %c0_10 = arith.constant 0 : index
    %c0_11 = arith.constant 0 : index
    %6 = vector.load %arg5[%c0_10, %c0_11] : memref<10x64xf32, #tpu.memory_space<vmem>>, vector<1x32xf32>
    %c1_12 = arith.constant 1 : index
    %c0_13 = arith.constant 0 : index
    %7 = vector.load %arg5[%c1_12, %c0_13] : memref<10x64xf32, #tpu.memory_space<vmem>>, vector<1x32xf32>
    %c2 = arith.constant 2 : index
    %c0_14 = arith.constant 0 : index
    %8 = vector.load %arg5[%c2, %c0_14] : memref<10x64xf32, #tpu.memory_space<vmem>>, vector<1x32xf32>
    %c3 = arith.constant 3 : index
    %c0_15 = arith.constant 0 : index
    %9 = vector.load %arg5[%c3, %c0_15] : memref<10x64xf32, #tpu.memory_space<vmem>>, vector<1x32xf32>
    %c4 = arith.constant 4 : index
    %c0_16 = arith.constant 0 : index
    %10 = vector.load %arg5[%c4, %c0_16] : memref<10x64xf32, #tpu.memory_space<vmem>>, vector<1x32xf32>
    %c5 = arith.constant 5 : index
    %c0_17 = arith.constant 0 : index
    %11 = vector.load %arg5[%c5, %c0_17] : memref<10x64xf32, #tpu.memory_space<vmem>>, vector<1x32xf32>
    %c6 = arith.constant 6 : index
    %c0_18 = arith.constant 0 : index
    %12 = vector.load %arg5[%c6, %c0_18] : memref<10x64xf32, #tpu.memory_space<vmem>>, vector<1x32xf32>
    %c7 = arith.constant 7 : index
    %c0_19 = arith.constant 0 : index
    %13 = vector.load %arg5[%c7, %c0_19] : memref<10x64xf32, #tpu.memory_space<vmem>>, vector<1x32xf32>
    %c8 = arith.constant 8 : index
    %c0_20 = arith.constant 0 : index
    %14 = vector.load %arg5[%c8, %c0_20] : memref<10x64xf32, #tpu.memory_space<vmem>>, vector<1x32xf32>
    %c9 = arith.constant 9 : index
    %c0_21 = arith.constant 0 : index
    %15 = vector.load %arg5[%c9, %c0_21] : memref<10x64xf32, #tpu.memory_space<vmem>>, vector<1x64xf32>
    %c0_22 = arith.constant 0 : index
    %c0_23 = arith.constant 0 : index
    %c0_24 = arith.constant 0 : index
    %16 = vector.load %arg3[%c0_22, %c0_23, %c0_24] : memref<4x32x32xf32, #tpu.memory_space<vmem>>, vector<1x32x32xf32>
    %17 = vector.shape_cast %16 : vector<1x32x32xf32> to vector<32x32xf32>
    %cst = arith.constant dense<0.000000e+00> : vector<16x32xf32>
    %18 = tpu.matmul %0, %17, %cst {dimension_numbers = #tpu.dot_dimension_numbers<[1], [0], [0], [1], [0, 0, 1, 1], [], []>} : vector<16x32xf32>, vector<32x32xf32>, vector<16x32xf32> -> vector<16x32xf32>
    %19 = vector.broadcast %6 : vector<1x32xf32> to vector<16x32xf32>
    %20 = arith.addf %18, %19 : vector<16x32xf32>
    %c1_25 = arith.constant 1 : index
    %c0_26 = arith.constant 0 : index
    %c0_27 = arith.constant 0 : index
    %21 = vector.load %arg3[%c1_25, %c0_26, %c0_27] : memref<4x32x32xf32, #tpu.memory_space<vmem>>, vector<1x32x32xf32>
    %22 = vector.shape_cast %21 : vector<1x32x32xf32> to vector<32x32xf32>
    %cst_28 = arith.constant dense<0.000000e+00> : vector<16x32xf32>
    %23 = tpu.matmul %1, %22, %cst_28 {dimension_numbers = #tpu.dot_dimension_numbers<[1], [0], [0], [1], [0, 0, 1, 1], [], []>} : vector<16x32xf32>, vector<32x32xf32>, vector<16x32xf32> -> vector<16x32xf32>
    %24 = vector.broadcast %7 : vector<1x32xf32> to vector<16x32xf32>
    %25 = arith.addf %23, %24 : vector<16x32xf32>
    %c2_29 = arith.constant 2 : index
    %c0_30 = arith.constant 0 : index
    %c0_31 = arith.constant 0 : index
    %26 = vector.load %arg3[%c2_29, %c0_30, %c0_31] : memref<4x32x32xf32, #tpu.memory_space<vmem>>, vector<1x32x32xf32>
    %27 = vector.shape_cast %26 : vector<1x32x32xf32> to vector<32x32xf32>
    %cst_32 = arith.constant dense<0.000000e+00> : vector<16x32xf32>
    %28 = tpu.matmul %1, %27, %cst_32 {dimension_numbers = #tpu.dot_dimension_numbers<[1], [0], [0], [1], [0, 0, 1, 1], [], []>} : vector<16x32xf32>, vector<32x32xf32>, vector<16x32xf32> -> vector<16x32xf32>
    %29 = vector.broadcast %8 : vector<1x32xf32> to vector<16x32xf32>
    %30 = arith.addf %28, %29 : vector<16x32xf32>
    %31 = vector.extract_strided_slice %20 {offsets = [0, 0], sizes = [16, 8], strides = [1, 1]} : vector<16x32xf32> to vector<16x8xf32>
    %32 = vector.extract_strided_slice %20 {offsets = [0, 8], sizes = [16, 8], strides = [1, 1]} : vector<16x32xf32> to vector<16x8xf32>
    %33 = vector.extract_strided_slice %20 {offsets = [0, 16], sizes = [16, 8], strides = [1, 1]} : vector<16x32xf32> to vector<16x8xf32>
    %34 = vector.extract_strided_slice %20 {offsets = [0, 24], sizes = [16, 8], strides = [1, 1]} : vector<16x32xf32> to vector<16x8xf32>
    %35 = vector.shape_cast %31 : vector<16x8xf32> to vector<1x16x8xf32>
    %36 = vector.shape_cast %32 : vector<16x8xf32> to vector<1x16x8xf32>
    %37 = vector.shape_cast %33 : vector<16x8xf32> to vector<1x16x8xf32>
    %38 = vector.shape_cast %34 : vector<16x8xf32> to vector<1x16x8xf32>
    %39 = tpu.concatenate %35, %36, %37, %38 in 0 : vector<1x16x8xf32>, vector<1x16x8xf32>, vector<1x16x8xf32>, vector<1x16x8xf32> -> vector<4x16x8xf32>
    %40 = vector.extract_strided_slice %25 {offsets = [0, 0], sizes = [16, 8], strides = [1, 1]} : vector<16x32xf32> to vector<16x8xf32>
    %41 = vector.extract_strided_slice %25 {offsets = [0, 8], sizes = [16, 8], strides = [1, 1]} : vector<16x32xf32> to vector<16x8xf32>
    %42 = vector.extract_strided_slice %25 {offsets = [0, 16], sizes = [16, 8], strides = [1, 1]} : vector<16x32xf32> to vector<16x8xf32>
    %43 = vector.extract_strided_slice %25 {offsets = [0, 24], sizes = [16, 8], strides = [1, 1]} : vector<16x32xf32> to vector<16x8xf32>
    %44 = vector.shape_cast %40 : vector<16x8xf32> to vector<1x16x8xf32>
    %45 = vector.shape_cast %41 : vector<16x8xf32> to vector<1x16x8xf32>
    %46 = vector.shape_cast %42 : vector<16x8xf32> to vector<1x16x8xf32>
    %47 = vector.shape_cast %43 : vector<16x8xf32> to vector<1x16x8xf32>
    %48 = tpu.concatenate %44, %45, %46, %47 in 0 : vector<1x16x8xf32>, vector<1x16x8xf32>, vector<1x16x8xf32>, vector<1x16x8xf32> -> vector<4x16x8xf32>
    %49 = vector.extract_strided_slice %30 {offsets = [0, 0], sizes = [16, 8], strides = [1, 1]} : vector<16x32xf32> to vector<16x8xf32>
    %50 = vector.extract_strided_slice %30 {offsets = [0, 8], sizes = [16, 8], strides = [1, 1]} : vector<16x32xf32> to vector<16x8xf32>
    %51 = vector.extract_strided_slice %30 {offsets = [0, 16], sizes = [16, 8], strides = [1, 1]} : vector<16x32xf32> to vector<16x8xf32>
    %52 = vector.extract_strided_slice %30 {offsets = [0, 24], sizes = [16, 8], strides = [1, 1]} : vector<16x32xf32> to vector<16x8xf32>
    %53 = vector.shape_cast %49 : vector<16x8xf32> to vector<1x16x8xf32>
    %54 = vector.shape_cast %50 : vector<16x8xf32> to vector<1x16x8xf32>
    %55 = vector.shape_cast %51 : vector<16x8xf32> to vector<1x16x8xf32>
    %56 = vector.shape_cast %52 : vector<16x8xf32> to vector<1x16x8xf32>
    %57 = tpu.concatenate %53, %54, %55, %56 in 0 : vector<1x16x8xf32>, vector<1x16x8xf32>, vector<1x16x8xf32>, vector<1x16x8xf32> -> vector<4x16x8xf32>
    %58 = vector.extract_strided_slice %39 {offsets = [0, 0, 4], sizes = [4, 16, 4], strides = [1, 1, 1]} : vector<4x16x8xf32> to vector<4x16x4xf32>
    %59 = vector.extract_strided_slice %39 {offsets = [0, 0, 0], sizes = [4, 16, 4], strides = [1, 1, 1]} : vector<4x16x8xf32> to vector<4x16x4xf32>
    %60 = tpu.concatenate %58, %59 in 2 : vector<4x16x4xf32>, vector<4x16x4xf32> -> vector<4x16x8xf32>
    %61 = arith.mulf %39, %3 : vector<4x16x8xf32>
    %62 = arith.mulf %60, %5 : vector<4x16x8xf32>
    %63 = arith.addf %61, %62 : vector<4x16x8xf32>
    %64 = vector.extract_strided_slice %48 {offsets = [0, 0, 4], sizes = [4, 16, 4], strides = [1, 1, 1]} : vector<4x16x8xf32> to vector<4x16x4xf32>
    %65 = vector.extract_strided_slice %48 {offsets = [0, 0, 0], sizes = [4, 16, 4], strides = [1, 1, 1]} : vector<4x16x8xf32> to vector<4x16x4xf32>
    %66 = tpu.concatenate %64, %65 in 2 : vector<4x16x4xf32>, vector<4x16x4xf32> -> vector<4x16x8xf32>
    %67 = arith.mulf %48, %3 : vector<4x16x8xf32>
    %68 = arith.mulf %66, %5 : vector<4x16x8xf32>
    %69 = arith.addf %67, %68 : vector<4x16x8xf32>
    "tpu.trace_start"() <{level = 10 : i32, message = "hnd,hmd->hnm"}> : () -> ()
    %cst_33 = arith.constant dense<0.000000e+00> : vector<4x16x16xf32>
    %70 = tpu.matmul %63, %69, %cst_33 {dimension_numbers = #tpu.dot_dimension_numbers<[2], [2], [1], [1], [0, 0, 0, 1, 1, 1], [0], [0]>} : vector<4x16x8xf32>, vector<4x16x8xf32>, vector<4x16x16xf32> -> vector<4x16x16xf32>
    "tpu.trace_stop"() : () -> ()
    %cst_34 = arith.constant 0.353553385 : f32
    %71 = vector.broadcast %cst_34 : f32 to vector<4x16x16xf32>
    %72 = arith.mulf %70, %71 : vector<4x16x16xf32>
    %cst_35 = arith.constant dense<0xFF800000> : vector<4x16xf32>
    %73 = vector.multi_reduction <maximumf>, %72, %cst_35 [2] : vector<4x16x16xf32> to vector<4x16xf32>
    %74 = vector.shape_cast %73 : vector<4x16xf32> to vector<4x16x1xf32>
    %75 = vector.broadcast %74 : vector<4x16x1xf32> to vector<4x16x16xf32>
    %76 = arith.subf %72, %75 : vector<4x16x16xf32>
    %77 = math.exp %76 : vector<4x16x16xf32>
    %cst_36 = arith.constant dense<0.000000e+00> : vector<4x16xf32>
    %78 = vector.multi_reduction <add>, %77, %cst_36 [2] : vector<4x16x16xf32> to vector<4x16xf32>
    %79 = vector.shape_cast %78 : vector<4x16xf32> to vector<4x16x1xf32>
    %80 = tpu.reciprocal %79 {approx = true} : vector<4x16x1xf32> -> vector<4x16x1xf32>
    %81 = vector.broadcast %80 : vector<4x16x1xf32> to vector<4x16x16xf32>
    %82 = arith.mulf %77, %81 : vector<4x16x16xf32>
    %c0_37 = arith.constant 0 : index
    %c0_38 = arith.constant 0 : index
    %c0_39 = arith.constant 0 : index
    %c0_40 = arith.constant 0 : index
    %83 = vector.load %arg7[%c0_37, %c0_38, %c0_39, %c0_40] : memref<1x4x16x16xf32, #tpu.memory_space<vmem>>, vector<1x4x16x16xf32>
    %84 = vector.shape_cast %83 : vector<1x4x16x16xf32> to vector<4x16x16xf32>
    %85 = vector.shape_cast %82 : vector<4x16x16xf32> to vector<1x4x16x16xf32>
    tpu.vector_store %arg7[%c0_37, %c0_38, %c0_39, %c0_40], %85 {strides = array<i32>} : memref<1x4x16x16xf32, #tpu.memory_space<vmem>>, vector<1x4x16x16xf32>,
    "tpu.trace_start"() <{level = 10 : i32, message = "hnm,hmd->hnd"}> : () -> ()
    %cst_41 = arith.constant dense<0.000000e+00> : vector<4x16x8xf32>
    %86 = tpu.matmul %82, %57, %cst_41 {dimension_numbers = #tpu.dot_dimension_numbers<[2], [1], [1], [2], [0, 0, 0, 1, 1, 2], [0], [0]>} : vector<4x16x16xf32>, vector<4x16x8xf32>, vector<4x16x8xf32> -> vector<4x16x8xf32>
    "tpu.trace_stop"() : () -> ()
    %87 = vector.extract_strided_slice %86 {offsets = [0, 0, 0], sizes = [1, 16, 8], strides = [1, 1, 1]} : vector<4x16x8xf32> to vector<1x16x8xf32>
    %88 = vector.shape_cast %87 : vector<1x16x8xf32> to vector<16x8xf32>
    %89 = vector.extract_strided_slice %86 {offsets = [1, 0, 0], sizes = [1, 16, 8], strides = [1, 1, 1]} : vector<4x16x8xf32> to vector<1x16x8xf32>
    %90 = vector.shape_cast %89 : vector<1x16x8xf32> to vector<16x8xf32>
    %91 = vector.extract_strided_slice %86 {offsets = [2, 0, 0], sizes = [1, 16, 8], strides = [1, 1, 1]} : vector<4x16x8xf32> to vector<1x16x8xf32>
    %92 = vector.shape_cast %91 : vector<1x16x8xf32> to vector<16x8xf32>
    %93 = vector.extract_strided_slice %86 {offsets = [3, 0, 0], sizes = [1, 16, 8], strides = [1, 1, 1]} : vector<4x16x8xf32> to vector<1x16x8xf32>
    %94 = vector.shape_cast %93 : vector<1x16x8xf32> to vector<16x8xf32>
    %95 = tpu.concatenate %88, %90, %92, %94 in 1 : vector<16x8xf32>, vector<16x8xf32>, vector<16x8xf32>, vector<16x8xf32> -> vector<16x32xf32>
    %c3_42 = arith.constant 3 : index
    %c0_43 = arith.constant 0 : index
    %c0_44 = arith.constant 0 : index
    %96 = vector.load %arg3[%c3_42, %c0_43, %c0_44] : memref<4x32x32xf32, #tpu.memory_space<vmem>>, vector<1x32x32xf32>
    %97 = vector.shape_cast %96 : vector<1x32x32xf32> to vector<32x32xf32>
    %cst_45 = arith.constant dense<0.000000e+00> : vector<16x32xf32>
    %98 = tpu.matmul %95, %97, %cst_45 {dimension_numbers = #tpu.dot_dimension_numbers<[1], [0], [0], [1], [0, 0, 1, 1], [], []>} : vector<16x32xf32>, vector<32x32xf32>, vector<16x32xf32> -> vector<16x32xf32>
    %99 = vector.broadcast %9 : vector<1x32xf32> to vector<16x32xf32>
    %100 = arith.addf %98, %99 : vector<16x32xf32>
    %101 = arith.addf %100, %0 : vector<16x32xf32>
    %cst_46 = arith.constant dense<0.000000e+00> : vector<16xf32>
    %102 = vector.multi_reduction <add>, %101, %cst_46 [1] : vector<16x32xf32> to vector<16xf32>
    %103 = vector.shape_cast %102 : vector<16xf32> to vector<16x1xf32>
    %cst_47 = arith.constant 3.200000e+01 : f32
    %104 = vector.broadcast %cst_47 : f32 to vector<16x1xf32>
    %105 = arith.divf %103, %104 : vector<16x1xf32>
    %106 = vector.broadcast %105 : vector<16x1xf32> to vector<16x32xf32>
    %107 = arith.subf %101, %106 : vector<16x32xf32>
    %108 = arith.mulf %107, %107 : vector<16x32xf32>
    %cst_48 = arith.constant dense<0.000000e+00> : vector<16xf32>
    %109 = vector.multi_reduction <add>, %108, %cst_48 [1] : vector<16x32xf32> to vector<16xf32>
    %110 = vector.shape_cast %109 : vector<16xf32> to vector<16x1xf32>
    %cst_49 = arith.constant 3.200000e+01 : f32
    %111 = vector.broadcast %cst_49 : f32 to vector<16x1xf32>
    %112 = arith.divf %110, %111 : vector<16x1xf32>
    %113 = vector.broadcast %105 : vector<16x1xf32> to vector<16x32xf32>
    %114 = arith.subf %101, %113 : vector<16x32xf32>
    %cst_50 = arith.constant 9.99999974E-6 : f32
    %115 = vector.broadcast %cst_50 : f32 to vector<16x1xf32>
    %116 = arith.addf %112, %115 : vector<16x1xf32>
    %117 = math.rsqrt %116 : vector<16x1xf32>
    %118 = vector.broadcast %117 : vector<16x1xf32> to vector<16x32xf32>
    %119 = arith.mulf %114, %118 : vector<16x32xf32>
    %120 = vector.broadcast %10 : vector<1x32xf32> to vector<16x32xf32>
    %121 = arith.mulf %119, %120 : vector<16x32xf32>
    %122 = vector.broadcast %11 : vector<1x32xf32> to vector<16x32xf32>
    %123 = arith.addf %121, %122 : vector<16x32xf32>
    %c0_51 = arith.constant 0 : index
    %c0_52 = arith.constant 0 : index
    %c0_53 = arith.constant 0 : index
    %124 = vector.load %arg4[%c0_51, %c0_52, %c0_53] : memref<2x32x64xf32, #tpu.memory_space<vmem>>, vector<1x32x64xf32>
    %125 = vector.shape_cast %124 : vector<1x32x64xf32> to vector<32x64xf32>
    %cst_54 = arith.constant dense<0.000000e+00> : vector<16x64xf32>
    %126 = tpu.matmul %123, %125, %cst_54 {dimension_numbers = #tpu.dot_dimension_numbers<[1], [0], [0], [1], [0, 0, 1, 1], [], []>} : vector<16x32xf32>, vector<32x64xf32>, vector<16x64xf32> -> vector<16x64xf32>
    %127 = vector.broadcast %15 : vector<1x64xf32> to vector<16x64xf32>
    %128 = arith.addf %126, %127 : vector<16x64xf32>
    %cst_55 = arith.constant 0.000000e+00 : f32
    %129 = vector.broadcast %cst_55 : f32 to vector<16x64xf32>
    %130 = arith.maximumf %128, %129 : vector<16x64xf32>
    %c1_56 = arith.constant 1 : index
    %c0_57 = arith.constant 0 : index
    %c0_58 = arith.constant 0 : index
    %131 = vector.load %arg4[%c1_56, %c0_57, %c0_58] : memref<2x32x64xf32, #tpu.memory_space<vmem>>, vector<1x32x64xf32>
    %132 = vector.shape_cast %131 : vector<1x32x64xf32> to vector<32x64xf32>
    %cst_59 = arith.constant dense<0.000000e+00> : vector<16x32xf32>
    %133 = tpu.matmul %130, %132, %cst_59 {dimension_numbers = #tpu.dot_dimension_numbers<[1], [1], [0], [0], [0, 0, 1, 0], [], []>} : vector<16x64xf32>, vector<32x64xf32>, vector<16x32xf32> -> vector<16x32xf32>
    %134 = vector.broadcast %12 : vector<1x32xf32> to vector<16x32xf32>
    %135 = arith.addf %133, %134 : vector<16x32xf32>
    %136 = arith.addf %123, %135 : vector<16x32xf32>
    %cst_60 = arith.constant dense<0.000000e+00> : vector<16xf32>
    %137 = vector.multi_reduction <add>, %136, %cst_60 [1] : vector<16x32xf32> to vector<16xf32>
    %138 = vector.shape_cast %137 : vector<16xf32> to vector<16x1xf32>
    %cst_61 = arith.constant 3.200000e+01 : f32
    %139 = vector.broadcast %cst_61 : f32 to vector<16x1xf32>
    %140 = arith.divf %138, %139 : vector<16x1xf32>
    %141 = vector.broadcast %140 : vector<16x1xf32> to vector<16x32xf32>
    %142 = arith.subf %136, %141 : vector<16x32xf32>
    %143 = arith.mulf %142, %142 : vector<16x32xf32>
    %cst_62 = arith.constant dense<0.000000e+00> : vector<16xf32>
    %144 = vector.multi_reduction <add>, %143, %cst_62 [1] : vector<16x32xf32> to vector<16xf32>
    %145 = vector.shape_cast %144 : vector<16xf32> to vector<16x1xf32>
    %cst_63 = arith.constant 3.200000e+01 : f32
    %146 = vector.broadcast %cst_63 : f32 to vector<16x1xf32>
    %147 = arith.divf %145, %146 : vector<16x1xf32>
    %148 = vector.broadcast %140 : vector<16x1xf32> to vector<16x32xf32>
    %149 = arith.subf %136, %148 : vector<16x32xf32>
    %cst_64 = arith.constant 9.99999974E-6 : f32
    %150 = vector.broadcast %cst_64 : f32 to vector<16x1xf32>
    %151 = arith.addf %147, %150 : vector<16x1xf32>
    %152 = math.rsqrt %151 : vector<16x1xf32>
    %153 = vector.broadcast %152 : vector<16x1xf32> to vector<16x32xf32>
    %154 = arith.mulf %149, %153 : vector<16x32xf32>
    %155 = vector.broadcast %13 : vector<1x32xf32> to vector<16x32xf32>
    %156 = arith.mulf %154, %155 : vector<16x32xf32>
    %157 = vector.broadcast %14 : vector<1x32xf32> to vector<16x32xf32>
    %158 = arith.addf %156, %157 : vector<16x32xf32>
    %c0_65 = arith.constant 0 : index
    %c0_66 = arith.constant 0 : index
    %c0_67 = arith.constant 0 : index
    %159 = vector.load %arg6[%c0_65, %c0_66, %c0_67] : memref<1x16x32xf32, #tpu.memory_space<vmem>>, vector<1x16x32xf32>
    %160 = vector.shape_cast %159 : vector<1x16x32xf32> to vector<16x32xf32>
    %161 = vector.shape_cast %158 : vector<16x32xf32> to vector<1x16x32xf32>
    tpu.vector_store %arg6[%c0_65, %c0_66, %c0_67], %161 {strides = array<i32>} : memref<1x16x32xf32, #tpu.memory_space<vmem>>, vector<1x16x32xf32>,
    return
  }
}

</mosaic_0001>

<llo_original>
// kernel: tpu_custom_call.1
$region0: #{tpu_custom_call.1}
  #allocation0 [shape = 'u32[]', space=smem, size = 0x4, offset = 0x4, fixed_abs, tag = 'smem constant byte address 0x4 - core index']
  #allocation1 [shape = 'u32[144,128]{1,0:T(1,128)}', space=vmem, size = 0x12000, scoped, tag = 'internal scratch']
  %s0 = inlined_call_operand.hbm [shape: f32[16,32], index: 0, kind: input, shape index: {}]
  %s1 = inlined_call_operand.hbm [shape: f32[16,32], index: 1, kind: input, shape index: {}]
  %s2 = inlined_call_operand.vmem [shape: f32[2,4,16,8], index: 2, kind: input, shape index: {}]
  %s3 = inlined_call_operand.vmem [shape: f32[4,32,32], index: 3, kind: input, shape index: {}]
  %s4 = inlined_call_operand.vmem [shape: f32[2,32,64], index: 4, kind: input, shape index: {}]
  %s5 = inlined_call_operand.vmem [shape: f32[10,64], index: 5, kind: input, shape index: {}]
  %s6 = inlined_call_operand.hbm [shape: f32[1,16,32], index: 6, kind: output, shape index: {0}]
  %s7 = inlined_call_operand.hbm [shape: f32[1,4,16,16], index: 7, kind: output, shape index: {1}]
  %8 = xla_tuple %s6, %s7
  %s9 = sld [smem:[#allocation0]]
  $region50: #{tpu_custom_call.1} parent=0
    _
  %s11 = ssub.s32 1, %s9
  %s12 = scalar_select 0, %s11, %s9
  $region1: #{tpu_custom_call.1} parent=0
    #allocation2 [shape = 'u8[8192]{0}', space=vmem, size = 0x2000, scoped, tag = 'input window, operand 0, single buffered']
    #allocation3 [shape = 's32[1]{0}', space=sflag, size = 0x4, scoped, tag = 'scoped memory for tpu_custom_call.1']
    #allocation4 [shape = 's32[1]{0}', space=sflag, size = 0x4, scoped, tag = 'scoped memory for tpu_custom_call.1']
    #allocation5 [shape = 'u8[8192]{0}', space=vmem, size = 0x2000, scoped, tag = 'input window, operand 1, single buffered']
    #allocation6 [shape = 's32[1]{0}', space=sflag, size = 0x4, scoped, tag = 'scoped memory for tpu_custom_call.1']
    #allocation7 [shape = 'u8[8192]{0}', space=vmem, size = 0x2000, scoped, tag = 'output window, operand 0, single buffered']
    #allocation8 [shape = 'u8[32768]{0}', space=vmem, size = 0x8000, scoped, tag = 'output window, operand 1, single buffered']
    #allocation9 [shape = 's32[1]{0}', space=sflag, size = 0x4, scoped, tag = 'scoped memory for tpu_custom_call.1']
    %13 = vsyncpa [#allocation3], 0
    %14 = vsyncpa [#allocation6], 0
    %15 = vsyncpa [#allocation4], 0
    %16 = vsyncpa [#allocation9], 0
    // Predicated region
    $region2: #{tpu_custom_call.1} parent=1 // pred_check
      _
    $region3: #{tpu_custom_call.1} parent=1 // pred_check_branch
      %18 = sbr.rel (0) target = $region5
    $region4: #{tpu_custom_call.1} parent=1 // pred_region
      %s20 = ssub.s32 256, 256
      %21 = vsyncadd [#allocation3], %s20
      %s22 = sshll.u32 [#allocation2], 4
      %s23 = int_to_ptr.vmem [resolvable:$true] %s22
      %28 = dma.hbm_to_vmem [thread:$0]  %s0, 256, %s23, [#allocation3], 128, 128, 8
    $region5: #{tpu_custom_call.1} parent=1 // pred_fallthru
      _
    // Predicated region
    $region6: #{tpu_custom_call.1} parent=1 // pred_check
      _
    $region7: #{tpu_custom_call.1} parent=1 // pred_check_branch
      %30 = sbr.rel (0) target = $region9
    $region8: #{tpu_custom_call.1} parent=1 // pred_region
      %s32 = ssub.s32 256, 256
      %33 = vsyncadd [#allocation6], %s32
      %s34 = sshll.u32 [#allocation5], 4
      %s35 = int_to_ptr.vmem [resolvable:$true] %s34
      %40 = dma.hbm_to_vmem [thread:$0]  %s1, 256, %s35, [#allocation6], 128, 128, 8
    $region9: #{tpu_custom_call.1} parent=1 // pred_fallthru
      _
    // Predicated region
    $region10: #{tpu_custom_call.1} parent=1 // pred_check
      _
    $region11: #{tpu_custom_call.1} parent=1 // pred_check_branch
      %42 = sbr.rel (0) target = $region13
    $region12: #{tpu_custom_call.1} parent=1 // pred_region
      _
    $region13: #{tpu_custom_call.1} parent=1 // pred_fallthru
      _
    // Predicated region
    $region14: #{tpu_custom_call.1} parent=1 // pred_check
      _
    $region15: #{tpu_custom_call.1} parent=1 // pred_check_branch
      %44 = sbr.rel (0) target = $region17
    $region16: #{tpu_custom_call.1} parent=1 // pred_region
      _
    $region17: #{tpu_custom_call.1} parent=1 // pred_fallthru
      _
    // Predicated region
    $region18: #{tpu_custom_call.1} parent=1 // pred_check
      _
    $region19: #{tpu_custom_call.1} parent=1 // pred_check_branch
      %46 = sbr.rel (0) target = $region21
    $region20: #{tpu_custom_call.1} parent=1 // pred_region
      _
    $region21: #{tpu_custom_call.1} parent=1 // pred_fallthru
      _
    // Predicated region
    $region22: #{tpu_custom_call.1} parent=1 // pred_check
      _
    $region23: #{tpu_custom_call.1} parent=1 // pred_check_branch
      %48 = sbr.rel (0) target = $region25
    $region24: #{tpu_custom_call.1} parent=1 // pred_region
      _
    $region25: #{tpu_custom_call.1} parent=1 // pred_fallthru
      _
    // Predicated region
    $region26: #{tpu_custom_call.1} parent=1 // pred_check
      _
    $region27: #{tpu_custom_call.1} parent=1 // pred_check_branch
      %50 = sbr.rel (0) target = $region29
    $region28: #{tpu_custom_call.1} parent=1 // pred_region
      %51 = dma.done [#allocation3], 256
    $region29: #{tpu_custom_call.1} parent=1 // pred_fallthru
      _
    // Predicated region
    $region30: #{tpu_custom_call.1} parent=1 // pred_check
      _
    $region31: #{tpu_custom_call.1} parent=1 // pred_check_branch
      %53 = sbr.rel (0) target = $region33
    $region32: #{tpu_custom_call.1} parent=1 // pred_region
      %54 = dma.done [#allocation6], 256
    $region33: #{tpu_custom_call.1} parent=1 // pred_fallthru
      _
    %v55 = vld [vmem:[#allocation2] sm:$0xff]
    %v56 = vld [vmem:[#allocation2 + $0x8] sm:$0xff]
    %v57 = vld [vmem:[#allocation5] sm:$0xff]
    %v58 = vld [vmem:[#allocation5 + $0x8] sm:$0xff]
    %v59 = vld [vmem:[%s2] sm:$0xff]
    %v60 = vld [vmem:[%s2 + $0x8] sm:$0xff]
    %v61 = vld [vmem:[%s2 + $0x10] sm:$0xff]
    %v62 = vld [vmem:[%s2 + $0x18] sm:$0xff]
    %v63 = vld [vmem:[%s2 + $0x20] sm:$0xff]
    %v64 = vld [vmem:[%s2 + $0x28] sm:$0xff]
    %v65 = vld [vmem:[%s2 + $0x30] sm:$0xff]
    %v66 = vld [vmem:[%s2 + $0x38] sm:$0xff]
    %s67 = scalar_lea.vmem %s2, 64
    %v68 = vld [vmem:[%s67] sm:$0xff]
    %v69 = vld [vmem:[%s67 + $0x8] sm:$0xff]
    %v70 = vld [vmem:[%s67 + $0x10] sm:$0xff]
    %v71 = vld [vmem:[%s67 + $0x18] sm:$0xff]
    %v72 = vld [vmem:[%s67 + $0x20] sm:$0xff]
    %v73 = vld [vmem:[%s67 + $0x28] sm:$0xff]
    %v74 = vld [vmem:[%s67 + $0x30] sm:$0xff]
    %v75 = vld [vmem:[%s67 + $0x38] sm:$0xff]
    %v76 = vld [vmem:[%s5] sm:$0x1]
    %v77 = vld [vmem:[%s5 + $0x1] sm:$0x1]
    %v78 = vld [vmem:[%s5 + $0x2] sm:$0x1]
    %v79 = vld [vmem:[%s5 + $0x3] sm:$0x1]
    %v80 = vld [vmem:[%s5 + $0x4] sm:$0x1]
    %v81 = vld [vmem:[%s5 + $0x5] sm:$0x1]
    %v82 = vld [vmem:[%s5 + $0x6] sm:$0x1]
    %v83 = vld [vmem:[%s5 + $0x7] sm:$0x1]
    %v84 = vld [vmem:[%s5 + $0x8] sm:$0x1]
    %v85 = vld [vmem:[%s5 + $0x9] sm:$0x1]
    %v86 = vld [vmem:[%s3] sm:$0xff]
    %v87 = vld [vmem:[%s3 + $0x8] sm:$0xff]
    %v88 = vld [vmem:[%s3 + $0x10] sm:$0xff]
    %v89 = vld [vmem:[%s3 + $0x18] sm:$0xff]
    %v90 = vlaneseq
    %v91 = vshrl.u32 %v90, 7
    %v92 = vsub.s32 0, %v91
    %v93 = vrot.slane %v76, %v92
    %vm94 = vcmask 261120
    %v96 = vsel %vm94, %v55, 0
    %v99 = vsel %vm94, %v56, 0
    %101 = vmatprep.subr.mxu0 0.0
    %102 = vmatpush1.msra.mxu0 %v86
    %103 = vmatprep.subr.mxu0 0.0
    %104 = vmatpush1.msra.mxu0 %v87
    %105 = vmatprep.subr.mxu0 0.0
    %106 = vmatpush1.msra.mxu0 %v88
    %107 = vmatprep.subr.mxu0 0.0
    %108 = vmatpush1.msra.mxu0 %v89
    %109 = vmatprep.subr.mxu0 0.0
    %110 = vmatpush1.msra.mxu0 0.0
    %111 = vmatprep.subr.mxu0 0.0
    %112 = vmatpush1.msra.mxu0 0.0
    %113 = vmatprep.subr.mxu0 0.0
    %114 = vmatpush1.msra.mxu0 0.0
    %115 = vmatprep.subr.mxu0 0.0
    %116 = vmatpush1.msra.mxu0 0.0
    %117 = vmatprep.subr.mxu0 0.0
    %118 = vmatpush1.msra.mxu0 0.0
    %119 = vmatprep.subr.mxu0 0.0
    %120 = vmatpush1.msra.mxu0 0.0
    %121 = vmatprep.subr.mxu0 0.0
    %122 = vmatpush1.msra.mxu0 0.0
    %123 = vmatprep.subr.mxu0 0.0
    %124 = vmatpush1.msra.mxu0 0.0
    %125 = vmatprep.subr.mxu0 0.0
    %126 = vmatpush1.msra.mxu0 0.0
    %127 = vmatprep.subr.mxu0 0.0
    %128 = vmatpush1.msra.mxu0 0.0
    %129 = vmatprep.subr.mxu0 0.0
    %130 = vmatpush1.msra.mxu0 0.0
    %131 = vmatprep.subr.mxu0 0.0
    %132 = vmatpush1.msra.mxu0 0.0
    %133 = vmatprep.subr.mxu0 0.0
    %134 = vmatpush1.msra.mxu0 0.0
    %135 = vmatprep.subr.mxu0 0.0
    %136 = vmatpush1.msra.mxu0 0.0
    %137 = vmatprep.subr.mxu0 0.0
    %138 = vmatpush1.msra.mxu0 0.0
    %139 = vmatprep.subr.mxu0 0.0
    %140 = vmatpush1.msra.mxu0 0.0
    %141 = vmatprep.subr.mxu0 0.0
    %142 = vmatpush1.msra.mxu0 0.0
    %143 = vmatprep.subr.mxu0 0.0
    %144 = vmatpush1.msra.mxu0 0.0
    %145 = vmatprep.subr.mxu0 0.0
    %146 = vmatpush1.msra.mxu0 0.0
    %147 = vmatprep.subr.mxu0 0.0
    %148 = vmatpush1.msra.mxu0 0.0
    %149 = vmatprep.subr.mxu0 0.0
    %150 = vmatpush1.msra.mxu0 0.0
    %151 = vmatprep.subr.mxu0 0.0
    %152 = vmatpush1.msra.mxu0 0.0
    %153 = vmatprep.subr.mxu0 0.0
    %154 = vmatpush1.msra.mxu0 0.0
    %155 = vmatprep.subr.mxu0 0.0
    %156 = vmatpush1.msra.mxu0 0.0
    %157 = vmatprep.subr.mxu0 0.0
    %158 = vmatpush1.msra.mxu0 0.0
    %159 = vmatprep.subr.mxu0 0.0
    %160 = vmatpush1.msra.mxu0 0.0
    %161 = vmatprep.subr.mxu0 0.0
    %162 = vmatpush1.msra.mxu0 0.0
    %163 = vmatprep.subr.mxu0 0.0
    %164 = vmatpush1.msra.mxu0 0.0
    %165 = vmatprep.mubr.f32.mxu0 0.0
    %166 = vmatmul.mubr.f32.gmra.mrb[0].mxu0 %v96
    %v167 = vpop.f32.mrb[0].mxu0
    %v168 = vadd.f32 %v93, %v167
    %v169 = vpop.f32.mrb[0].mxu0
    %170 = vmatprep.mubr.f32.mxu0 0.0
    %171 = vmatmul.mubr.f32.gmra.mrb[0].mxu0 %v99
    %v172 = vpop.f32.mrb[0].mxu0
    %v173 = vadd.f32 %v93, %v172
    %v174 = vpop.f32.mrb[0].mxu0
    %175 = vdwg.mxu0
    %s176 = scalar_lea.vmem %s3, 32
    %v177 = vld [vmem:[%s176] sm:$0xff]
    %v178 = vld [vmem:[%s176 + $0x8] sm:$0xff]
    %v179 = vld [vmem:[%s176 + $0x10] sm:$0xff]
    %v180 = vld [vmem:[%s176 + $0x18] sm:$0xff]
    %v181 = vlaneseq
    %v182 = vshrl.u32 %v181, 7
    %v183 = vsub.s32 0, %v182
    %v184 = vrot.slane %v77, %v183
    %v186 = vsel %vm94, %v57, 0
    %v189 = vsel %vm94, %v58, 0
    %191 = vmatprep.subr.mxu0 0.0
    %192 = vmatpush1.msra.mxu0 %v177
    %193 = vmatprep.subr.mxu0 0.0
    %194 = vmatpush1.msra.mxu0 %v178
    %195 = vmatprep.subr.mxu0 0.0
    %196 = vmatpush1.msra.mxu0 %v179
    %197 = vmatprep.subr.mxu0 0.0
    %198 = vmatpush1.msra.mxu0 %v180
    %199 = vmatprep.subr.mxu0 0.0
    %200 = vmatpush1.msra.mxu0 0.0
    %201 = vmatprep.subr.mxu0 0.0
    %202 = vmatpush1.msra.mxu0 0.0
    %203 = vmatprep.subr.mxu0 0.0
    %204 = vmatpush1.msra.mxu0 0.0
    %205 = vmatprep.subr.mxu0 0.0
    %206 = vmatpush1.msra.mxu0 0.0
    %207 = vmatprep.subr.mxu0 0.0
    %208 = vmatpush1.msra.mxu0 0.0
    %209 = vmatprep.subr.mxu0 0.0
    %210 = vmatpush1.msra.mxu0 0.0
    %211 = vmatprep.subr.mxu0 0.0
    %212 = vmatpush1.msra.mxu0 0.0
    %213 = vmatprep.subr.mxu0 0.0
    %214 = vmatpush1.msra.mxu0 0.0
    %215 = vmatprep.subr.mxu0 0.0
    %216 = vmatpush1.msra.mxu0 0.0
    %217 = vmatprep.subr.mxu0 0.0
    %218 = vmatpush1.msra.mxu0 0.0
    %219 = vmatprep.subr.mxu0 0.0
    %220 = vmatpush1.msra.mxu0 0.0
    %221 = vmatprep.subr.mxu0 0.0
    %222 = vmatpush1.msra.mxu0 0.0
    %223 = vmatprep.subr.mxu0 0.0
    %224 = vmatpush1.msra.mxu0 0.0
    %225 = vmatprep.subr.mxu0 0.0
    %226 = vmatpush1.msra.mxu0 0.0
    %227 = vmatprep.subr.mxu0 0.0
    %228 = vmatpush1.msra.mxu0 0.0
    %229 = vmatprep.subr.mxu0 0.0
    %230 = vmatpush1.msra.mxu0 0.0
    %231 = vmatprep.subr.mxu0 0.0
    %232 = vmatpush1.msra.mxu0 0.0
    %233 = vmatprep.subr.mxu0 0.0
    %234 = vmatpush1.msra.mxu0 0.0
    %235 = vmatprep.subr.mxu0 0.0
    %236 = vmatpush1.msra.mxu0 0.0
    %237 = vmatprep.subr.mxu0 0.0
    %238 = vmatpush1.msra.mxu0 0.0
    %239 = vmatprep.subr.mxu0 0.0
    %240 = vmatpush1.msra.mxu0 0.0
    %241 = vmatprep.subr.mxu0 0.0
    %242 = vmatpush1.msra.mxu0 0.0
    %243 = vmatprep.subr.mxu0 0.0
    %244 = vmatpush1.msra.mxu0 0.0
    %245 = vmatprep.subr.mxu0 0.0
    %246 = vmatpush1.msra.mxu0 0.0
    %247 = vmatprep.subr.mxu0 0.0
    %248 = vmatpush1.msra.mxu0 0.0
    %249 = vmatprep.subr.mxu0 0.0
    %250 = vmatpush1.msra.mxu0 0.0
    %251 = vmatprep.subr.mxu0 0.0
    %252 = vmatpush1.msra.mxu0 0.0
    %253 = vmatprep.subr.mxu0 0.0
    %254 = vmatpush1.msra.mxu0 0.0
    %255 = vmatprep.mubr.f32.mxu0 0.0
    %256 = vmatmul.mubr.f32.gmra.mrb[0].mxu0 %v186
    %v257 = vpop.f32.mrb[0].mxu0
    %v258 = vadd.f32 %v184, %v257
    %v259 = vpop.f32.mrb[0].mxu0
    %260 = vmatprep.mubr.f32.mxu0 0.0
    %261 = vmatmul.mubr.f32.gmra.mrb[0].mxu0 %v189
    %v262 = vpop.f32.mrb[0].mxu0
    %v263 = vadd.f32 %v184, %v262
    %v264 = vpop.f32.mrb[0].mxu0
    %265 = vdwg.mxu0
    %s266 = scalar_lea.vmem %s3, 64
    %v267 = vld [vmem:[%s266] sm:$0xff]
    %v268 = vld [vmem:[%s266 + $0x8] sm:$0xff]
    %v269 = vld [vmem:[%s266 + $0x10] sm:$0xff]
    %v270 = vld [vmem:[%s266 + $0x18] sm:$0xff]
    %v271 = vlaneseq
    %v272 = vshrl.u32 %v271, 7
    %v273 = vsub.s32 0, %v272
    %v274 = vrot.slane %v78, %v273
    %275 = vmatprep.subr.mxu0 0.0
    %276 = vmatpush1.msra.mxu0 %v267
    %277 = vmatprep.subr.mxu0 0.0
    %278 = vmatpush1.msra.mxu0 %v268
    %279 = vmatprep.subr.mxu0 0.0
    %280 = vmatpush1.msra.mxu0 %v269
    %281 = vmatprep.subr.mxu0 0.0
    %282 = vmatpush1.msra.mxu0 %v270
    %283 = vmatprep.subr.mxu0 0.0
    %284 = vmatpush1.msra.mxu0 0.0
    %285 = vmatprep.subr.mxu0 0.0
    %286 = vmatpush1.msra.mxu0 0.0
    %287 = vmatprep.subr.mxu0 0.0
    %288 = vmatpush1.msra.mxu0 0.0
    %289 = vmatprep.subr.mxu0 0.0
    %290 = vmatpush1.msra.mxu0 0.0
    %291 = vmatprep.subr.mxu0 0.0
    %292 = vmatpush1.msra.mxu0 0.0
    %293 = vmatprep.subr.mxu0 0.0
    %294 = vmatpush1.msra.mxu0 0.0
    %295 = vmatprep.subr.mxu0 0.0
    %296 = vmatpush1.msra.mxu0 0.0
    %297 = vmatprep.subr.mxu0 0.0
    %298 = vmatpush1.msra.mxu0 0.0
    %299 = vmatprep.subr.mxu0 0.0
    %300 = vmatpush1.msra.mxu0 0.0
    %301 = vmatprep.subr.mxu0 0.0
    %302 = vmatpush1.msra.mxu0 0.0
    %303 = vmatprep.subr.mxu0 0.0
    %304 = vmatpush1.msra.mxu0 0.0
    %305 = vmatprep.subr.mxu0 0.0
    %306 = vmatpush1.msra.mxu0 0.0
    %307 = vmatprep.subr.mxu0 0.0
    %308 = vmatpush1.msra.mxu0 0.0
    %309 = vmatprep.subr.mxu0 0.0
    %310 = vmatpush1.msra.mxu0 0.0
    %311 = vmatprep.subr.mxu0 0.0
    %312 = vmatpush1.msra.mxu0 0.0
    %313 = vmatprep.subr.mxu0 0.0
    %314 = vmatpush1.msra.mxu0 0.0
    %315 = vmatprep.subr.mxu0 0.0
    %316 = vmatpush1.msra.mxu0 0.0
    %317 = vmatprep.subr.mxu0 0.0
    %318 = vmatpush1.msra.mxu0 0.0
    %319 = vmatprep.subr.mxu0 0.0
    %320 = vmatpush1.msra.mxu0 0.0
    %321 = vmatprep.subr.mxu0 0.0
    %322 = vmatpush1.msra.mxu0 0.0
    %323 = vmatprep.subr.mxu0 0.0
    %324 = vmatpush1.msra.mxu0 0.0
    %325 = vmatprep.subr.mxu0 0.0
    %326 = vmatpush1.msra.mxu0 0.0
    %327 = vmatprep.subr.mxu0 0.0
    %328 = vmatpush1.msra.mxu0 0.0
    %329 = vmatprep.subr.mxu0 0.0
    %330 = vmatpush1.msra.mxu0 0.0
    %331 = vmatprep.subr.mxu0 0.0
    %332 = vmatpush1.msra.mxu0 0.0
    %333 = vmatprep.subr.mxu0 0.0
    %334 = vmatpush1.msra.mxu0 0.0
    %335 = vmatprep.subr.mxu0 0.0
    %336 = vmatpush1.msra.mxu0 0.0
    %337 = vmatprep.subr.mxu0 0.0
    %338 = vmatpush1.msra.mxu0 0.0
    %339 = vmatprep.mubr.f32.mxu0 0.0
    %340 = vmatmul.mubr.f32.gmra.mrb[0].mxu0 %v186
    %v341 = vpop.f32.mrb[0].mxu0
    %v342 = vadd.f32 %v274, %v341
    %v343 = vpop.f32.mrb[0].mxu0
    %344 = vmatprep.mubr.f32.mxu0 0.0
    %345 = vmatmul.mubr.f32.gmra.mrb[0].mxu0 %v189
    %v346 = vpop.f32.mrb[0].mxu0
    %v347 = vadd.f32 %v274, %v346
    %v348 = vpop.f32.mrb[0].mxu0
    %349 = vdwg.mxu0
    %352 = vrot.lane.b32.xlu0 %v168, 120
    %v353 = vpop.permute.xlu0 %352
    %354 = vrot.lane.b32.xlu0 %v173, 120
    %v355 = vpop.permute.xlu0 %354
    %358 = vrot.lane.b32.xlu0 %v168, 112
    %v359 = vpop.permute.xlu0 %358
    %360 = vrot.lane.b32.xlu0 %v173, 112
    %v361 = vpop.permute.xlu0 %360
    %364 = vrot.lane.b32.xlu0 %v168, 104
    %v365 = vpop.permute.xlu0 %364
    %366 = vrot.lane.b32.xlu0 %v173, 104
    %v367 = vpop.permute.xlu0 %366
    %372 = vrot.lane.b32.xlu0 %v258, 120
    %v373 = vpop.permute.xlu0 %372
    %374 = vrot.lane.b32.xlu0 %v263, 120
    %v375 = vpop.permute.xlu0 %374
    %378 = vrot.lane.b32.xlu0 %v258, 112
    %v379 = vpop.permute.xlu0 %378
    %380 = vrot.lane.b32.xlu0 %v263, 112
    %v381 = vpop.permute.xlu0 %380
    %384 = vrot.lane.b32.xlu0 %v258, 104
    %v385 = vpop.permute.xlu0 %384
    %386 = vrot.lane.b32.xlu0 %v263, 104
    %v387 = vpop.permute.xlu0 %386
    %392 = vrot.lane.b32.xlu0 %v342, 120
    %v393 = vpop.permute.xlu0 %392
    %394 = vrot.lane.b32.xlu0 %v347, 120
    %v395 = vpop.permute.xlu0 %394
    %398 = vrot.lane.b32.xlu0 %v342, 112
    %v399 = vpop.permute.xlu0 %398
    %400 = vrot.lane.b32.xlu0 %v347, 112
    %v401 = vpop.permute.xlu0 %400
    %404 = vrot.lane.b32.xlu0 %v342, 104
    %v405 = vpop.permute.xlu0 %404
    %406 = vrot.lane.b32.xlu0 %v347, 104
    %v407 = vpop.permute.xlu0 %406
    %410 = vrot.lane.b32.xlu0 %v168, 124
    %v411 = vpop.permute.xlu0 %410
    %412 = vrot.lane.b32.xlu0 %v173, 124
    %v413 = vpop.permute.xlu0 %412
    %414 = vrot.lane.b32.xlu0 %v353, 124
    %v415 = vpop.permute.xlu0 %414
    %416 = vrot.lane.b32.xlu0 %v355, 124
    %v417 = vpop.permute.xlu0 %416
    %418 = vrot.lane.b32.xlu0 %v359, 124
    %v419 = vpop.permute.xlu0 %418
    %420 = vrot.lane.b32.xlu0 %v361, 124
    %v421 = vpop.permute.xlu0 %420
    %422 = vrot.lane.b32.xlu0 %v365, 124
    %v423 = vpop.permute.xlu0 %422
    %424 = vrot.lane.b32.xlu0 %v367, 124
    %v425 = vpop.permute.xlu0 %424
    %434 = vrot.lane.b32.xlu0 %v168, 4
    %v435 = vpop.permute.xlu0 %434
    %436 = vrot.lane.b32.xlu0 %v173, 4
    %v437 = vpop.permute.xlu0 %436
    %438 = vrot.lane.b32.xlu0 %v353, 4
    %v439 = vpop.permute.xlu0 %438
    %440 = vrot.lane.b32.xlu0 %v355, 4
    %v441 = vpop.permute.xlu0 %440
    %442 = vrot.lane.b32.xlu0 %v359, 4
    %v443 = vpop.permute.xlu0 %442
    %444 = vrot.lane.b32.xlu0 %v361, 4
    %v445 = vpop.permute.xlu0 %444
    %446 = vrot.lane.b32.xlu0 %v365, 4
    %v447 = vpop.permute.xlu0 %446
    %448 = vrot.lane.b32.xlu0 %v367, 4
    %v449 = vpop.permute.xlu0 %448
    %vm458 = vcmask 31744
    %v459 = vsel %vm458, %v411, %v435
    %v460 = vsel %vm458, %v413, %v437
    %v461 = vsel %vm458, %v415, %v439
    %v462 = vsel %vm458, %v417, %v441
    %v463 = vsel %vm458, %v419, %v443
    %v464 = vsel %vm458, %v421, %v445
    %v465 = vsel %vm458, %v423, %v447
    %v466 = vsel %vm458, %v425, %v449
    %v467 = vmul.f32 %v168, %v59
    %v468 = vmul.f32 %v173, %v60
    %v469 = vmul.f32 %v353, %v61
    %v470 = vmul.f32 %v355, %v62
    %v471 = vmul.f32 %v359, %v63
    %v472 = vmul.f32 %v361, %v64
    %v473 = vmul.f32 %v365, %v65
    %v474 = vmul.f32 %v367, %v66
    %v475 = vmul.f32 %v459, %v68
    %v476 = vmul.f32 %v460, %v69
    %v477 = vmul.f32 %v461, %v70
    %v478 = vmul.f32 %v462, %v71
    %v479 = vmul.f32 %v463, %v72
    %v480 = vmul.f32 %v464, %v73
    %v481 = vmul.f32 %v465, %v74
    %v482 = vmul.f32 %v466, %v75
    %v483 = vadd.f32 %v467, %v475
    %v484 = vadd.f32 %v468, %v476
    %v485 = vadd.f32 %v469, %v477
    %v486 = vadd.f32 %v470, %v478
    %v487 = vadd.f32 %v471, %v479
    %v488 = vadd.f32 %v472, %v480
    %v489 = vadd.f32 %v473, %v481
    %v490 = vadd.f32 %v474, %v482
    %491 = vrot.lane.b32.xlu0 %v258, 124
    %v492 = vpop.permute.xlu0 %491
    %493 = vrot.lane.b32.xlu0 %v263, 124
    %v494 = vpop.permute.xlu0 %493
    %495 = vrot.lane.b32.xlu0 %v373, 124
    %v496 = vpop.permute.xlu0 %495
    %497 = vrot.lane.b32.xlu0 %v375, 124
    %v498 = vpop.permute.xlu0 %497
    %499 = vrot.lane.b32.xlu0 %v379, 124
    %v500 = vpop.permute.xlu0 %499
    %501 = vrot.lane.b32.xlu0 %v381, 124
    %v502 = vpop.permute.xlu0 %501
    %503 = vrot.lane.b32.xlu0 %v385, 124
    %v504 = vpop.permute.xlu0 %503
    %505 = vrot.lane.b32.xlu0 %v387, 124
    %v506 = vpop.permute.xlu0 %505
    %515 = vrot.lane.b32.xlu0 %v258, 4
    %v516 = vpop.permute.xlu0 %515
    %517 = vrot.lane.b32.xlu0 %v263, 4
    %v518 = vpop.permute.xlu0 %517
    %519 = vrot.lane.b32.xlu0 %v373, 4
    %v520 = vpop.permute.xlu0 %519
    %521 = vrot.lane.b32.xlu0 %v375, 4
    %v522 = vpop.permute.xlu0 %521
    %523 = vrot.lane.b32.xlu0 %v379, 4
    %v524 = vpop.permute.xlu0 %523
    %525 = vrot.lane.b32.xlu0 %v381, 4
    %v526 = vpop.permute.xlu0 %525
    %527 = vrot.lane.b32.xlu0 %v385, 4
    %v528 = vpop.permute.xlu0 %527
    %529 = vrot.lane.b32.xlu0 %v387, 4
    %v530 = vpop.permute.xlu0 %529
    %v539 = vsel %vm458, %v492, %v516
    %v540 = vsel %vm458, %v494, %v518
    %v541 = vsel %vm458, %v496, %v520
    %v542 = vsel %vm458, %v498, %v522
    %v543 = vsel %vm458, %v500, %v524
    %v544 = vsel %vm458, %v502, %v526
    %v545 = vsel %vm458, %v504, %v528
    %v546 = vsel %vm458, %v506, %v530
    %v547 = vmul.f32 %v258, %v59
    %v548 = vmul.f32 %v263, %v60
    %v549 = vmul.f32 %v373, %v61
    %v550 = vmul.f32 %v375, %v62
    %v551 = vmul.f32 %v379, %v63
    %v552 = vmul.f32 %v381, %v64
    %v553 = vmul.f32 %v385, %v65
    %v554 = vmul.f32 %v387, %v66
    %v555 = vmul.f32 %v539, %v68
    %v556 = vmul.f32 %v540, %v69
    %v557 = vmul.f32 %v541, %v70
    %v558 = vmul.f32 %v542, %v71
    %v559 = vmul.f32 %v543, %v72
    %v560 = vmul.f32 %v544, %v73
    %v561 = vmul.f32 %v545, %v74
    %v562 = vmul.f32 %v546, %v75
    %v563 = vadd.f32 %v547, %v555
    %v564 = vadd.f32 %v548, %v556
    %v565 = vadd.f32 %v549, %v557
    %v566 = vadd.f32 %v550, %v558
    %v567 = vadd.f32 %v551, %v559
    %v568 = vadd.f32 %v552, %v560
    %v569 = vadd.f32 %v553, %v561
    %v570 = vadd.f32 %v554, %v562
    %vm571 = vcmask 64512
    %v573 = vsel %vm571, %v483, 0
    %v576 = vsel %vm571, %v484, 0
    %v579 = vsel %vm571, %v563, 0
    %v582 = vsel %vm571, %v564, 0
    %584 = vmatprep.subr.mxu0 0.0
    %585 = vmatpush1.xpose.msra.mxu0 %v579
    %586 = vmatprep.subr.mxu0 0.0
    %587 = vmatpush1.xpose.msra.mxu0 %v582
    %588 = vmatprep.subr.mxu0 0.0
    %589 = vmatpush1.xpose.msra.mxu0 0.0
    %590 = vmatprep.subr.mxu0 0.0
    %591 = vmatpush1.xpose.msra.mxu0 0.0
    %592 = vmatprep.subr.mxu0 0.0
    %593 = vmatpush1.xpose.msra.mxu0 0.0
    %594 = vmatprep.subr.mxu0 0.0
    %595 = vmatpush1.xpose.msra.mxu0 0.0
    %596 = vmatprep.subr.mxu0 0.0
    %597 = vmatpush1.xpose.msra.mxu0 0.0
    %598 = vmatprep.subr.mxu0 0.0
    %599 = vmatpush1.xpose.msra.mxu0 0.0
    %600 = vmatprep.subr.mxu0 0.0
    %601 = vmatpush1.xpose.msra.mxu0 0.0
    %602 = vmatprep.subr.mxu0 0.0
    %603 = vmatpush1.xpose.msra.mxu0 0.0
    %604 = vmatprep.subr.mxu0 0.0
    %605 = vmatpush1.xpose.msra.mxu0 0.0
    %606 = vmatprep.subr.mxu0 0.0
    %607 = vmatpush1.xpose.msra.mxu0 0.0
    %608 = vmatprep.subr.mxu0 0.0
    %609 = vmatpush1.xpose.msra.mxu0 0.0
    %610 = vmatprep.subr.mxu0 0.0
    %611 = vmatpush1.xpose.msra.mxu0 0.0
    %612 = vmatprep.subr.mxu0 0.0
    %613 = vmatpush1.xpose.msra.mxu0 0.0
    %614 = vmatprep.subr.mxu0 0.0
    %615 = vmatpush1.xpose.msra.mxu0 0.0
    %616 = vmatprep.subr.mxu0 0.0
    %617 = vmatpush1.xpose.msra.mxu0 0.0
    %618 = vmatprep.subr.mxu0 0.0
    %619 = vmatpush1.xpose.msra.mxu0 0.0
    %620 = vmatprep.subr.mxu0 0.0
    %621 = vmatpush1.xpose.msra.mxu0 0.0
    %622 = vmatprep.subr.mxu0 0.0
    %623 = vmatpush1.xpose.msra.mxu0 0.0
    %624 = vmatprep.subr.mxu0 0.0
    %625 = vmatpush1.xpose.msra.mxu0 0.0
    %626 = vmatprep.subr.mxu0 0.0
    %627 = vmatpush1.xpose.msra.mxu0 0.0
    %628 = vmatprep.subr.mxu0 0.0
    %629 = vmatpush1.xpose.msra.mxu0 0.0
    %630 = vmatprep.subr.mxu0 0.0
    %631 = vmatpush1.xpose.msra.mxu0 0.0
    %632 = vmatprep.subr.mxu0 0.0
    %633 = vmatpush1.xpose.msra.mxu0 0.0
    %634 = vmatprep.subr.mxu0 0.0
    %635 = vmatpush1.xpose.msra.mxu0 0.0
    %636 = vmatprep.subr.mxu0 0.0
    %637 = vmatpush1.xpose.msra.mxu0 0.0
    %638 = vmatprep.subr.mxu0 0.0
    %639 = vmatpush1.xpose.msra.mxu0 0.0
    %640 = vmatprep.subr.mxu0 0.0
    %641 = vmatpush1.xpose.msra.mxu0 0.0
    %642 = vmatprep.subr.mxu0 0.0
    %643 = vmatpush1.xpose.msra.mxu0 0.0
    %644 = vmatprep.subr.mxu0 0.0
    %645 = vmatpush1.xpose.msra.mxu0 0.0
    %646 = vmatprep.subr.mxu0 0.0
    %647 = vmatpush1.xpose.msra.mxu0 0.0
    %648 = vmatprep.mubr.f32.mxu0 0.0
    %649 = vmatmul.mubr.f32.gmra.mrb[0].mxu0 %v573
    %v650 = vpop.f32.mrb[0].mxu0
    %v651 = vadd.f32 0.0, %v650
    %v652 = vpop.f32.mrb[0].mxu0
    %653 = vmatprep.mubr.f32.mxu0 0.0
    %654 = vmatmul.mubr.f32.gmra.mrb[0].mxu0 %v576
    %v655 = vpop.f32.mrb[0].mxu0
    %v656 = vadd.f32 0.0, %v655
    %v657 = vpop.f32.mrb[0].mxu0
    %658 = vdwg.mxu0
    %v660 = vsel %vm571, %v485, 0
    %v663 = vsel %vm571, %v486, 0
    %v666 = vsel %vm571, %v565, 0
    %v669 = vsel %vm571, %v566, 0
    %671 = vmatprep.subr.mxu0 0.0
    %672 = vmatpush1.xpose.msra.mxu0 %v666
    %673 = vmatprep.subr.mxu0 0.0
    %674 = vmatpush1.xpose.msra.mxu0 %v669
    %675 = vmatprep.subr.mxu0 0.0
    %676 = vmatpush1.xpose.msra.mxu0 0.0
    %677 = vmatprep.subr.mxu0 0.0
    %678 = vmatpush1.xpose.msra.mxu0 0.0
    %679 = vmatprep.subr.mxu0 0.0
    %680 = vmatpush1.xpose.msra.mxu0 0.0
    %681 = vmatprep.subr.mxu0 0.0
    %682 = vmatpush1.xpose.msra.mxu0 0.0
    %683 = vmatprep.subr.mxu0 0.0
    %684 = vmatpush1.xpose.msra.mxu0 0.0
    %685 = vmatprep.subr.mxu0 0.0
    %686 = vmatpush1.xpose.msra.mxu0 0.0
    %687 = vmatprep.subr.mxu0 0.0
    %688 = vmatpush1.xpose.msra.mxu0 0.0
    %689 = vmatprep.subr.mxu0 0.0
    %690 = vmatpush1.xpose.msra.mxu0 0.0
    %691 = vmatprep.subr.mxu0 0.0
    %692 = vmatpush1.xpose.msra.mxu0 0.0
    %693 = vmatprep.subr.mxu0 0.0
    %694 = vmatpush1.xpose.msra.mxu0 0.0
    %695 = vmatprep.subr.mxu0 0.0
    %696 = vmatpush1.xpose.msra.mxu0 0.0
    %697 = vmatprep.subr.mxu0 0.0
    %698 = vmatpush1.xpose.msra.mxu0 0.0
    %699 = vmatprep.subr.mxu0 0.0
    %700 = vmatpush1.xpose.msra.mxu0 0.0
    %701 = vmatprep.subr.mxu0 0.0
    %702 = vmatpush1.xpose.msra.mxu0 0.0
    %703 = vmatprep.subr.mxu0 0.0
    %704 = vmatpush1.xpose.msra.mxu0 0.0
    %705 = vmatprep.subr.mxu0 0.0
    %706 = vmatpush1.xpose.msra.mxu0 0.0
    %707 = vmatprep.subr.mxu0 0.0
    %708 = vmatpush1.xpose.msra.mxu0 0.0
    %709 = vmatprep.subr.mxu0 0.0
    %710 = vmatpush1.xpose.msra.mxu0 0.0
    %711 = vmatprep.subr.mxu0 0.0
    %712 = vmatpush1.xpose.msra.mxu0 0.0
    %713 = vmatprep.subr.mxu0 0.0
    %714 = vmatpush1.xpose.msra.mxu0 0.0
    %715 = vmatprep.subr.mxu0 0.0
    %716 = vmatpush1.xpose.msra.mxu0 0.0
    %717 = vmatprep.subr.mxu0 0.0
    %718 = vmatpush1.xpose.msra.mxu0 0.0
    %719 = vmatprep.subr.mxu0 0.0
    %720 = vmatpush1.xpose.msra.mxu0 0.0
    %721 = vmatprep.subr.mxu0 0.0
    %722 = vmatpush1.xpose.msra.mxu0 0.0
    %723 = vmatprep.subr.mxu0 0.0
    %724 = vmatpush1.xpose.msra.mxu0 0.0
    %725 = vmatprep.subr.mxu0 0.0
    %726 = vmatpush1.xpose.msra.mxu0 0.0
    %727 = vmatprep.subr.mxu0 0.0
    %728 = vmatpush1.xpose.msra.mxu0 0.0
    %729 = vmatprep.subr.mxu0 0.0
    %730 = vmatpush1.xpose.msra.mxu0 0.0
    %731 = vmatprep.subr.mxu0 0.0
    %732 = vmatpush1.xpose.msra.mxu0 0.0
    %733 = vmatprep.subr.mxu0 0.0
    %734 = vmatpush1.xpose.msra.mxu0 0.0
    %735 = vmatprep.mubr.f32.mxu0 0.0
    %736 = vmatmul.mubr.f32.gmra.mrb[0].mxu0 %v660
    %v737 = vpop.f32.mrb[0].mxu0
    %v738 = vadd.f32 0.0, %v737
    %v739 = vpop.f32.mrb[0].mxu0
    %740 = vmatprep.mubr.f32.mxu0 0.0
    %741 = vmatmul.mubr.f32.gmra.mrb[0].mxu0 %v663
    %v742 = vpop.f32.mrb[0].mxu0
    %v743 = vadd.f32 0.0, %v742
    %v744 = vpop.f32.mrb[0].mxu0
    %745 = vdwg.mxu0
    %v747 = vsel %vm571, %v487, 0
    %v750 = vsel %vm571, %v488, 0
    %v753 = vsel %vm571, %v567, 0
    %v756 = vsel %vm571, %v568, 0
    %758 = vmatprep.subr.mxu0 0.0
    %759 = vmatpush1.xpose.msra.mxu0 %v753
    %760 = vmatprep.subr.mxu0 0.0
    %761 = vmatpush1.xpose.msra.mxu0 %v756
    %762 = vmatprep.subr.mxu0 0.0
    %763 = vmatpush1.xpose.msra.mxu0 0.0
    %764 = vmatprep.subr.mxu0 0.0
    %765 = vmatpush1.xpose.msra.mxu0 0.0
    %766 = vmatprep.subr.mxu0 0.0
    %767 = vmatpush1.xpose.msra.mxu0 0.0
    %768 = vmatprep.subr.mxu0 0.0
    %769 = vmatpush1.xpose.msra.mxu0 0.0
    %770 = vmatprep.subr.mxu0 0.0
    %771 = vmatpush1.xpose.msra.mxu0 0.0
    %772 = vmatprep.subr.mxu0 0.0
    %773 = vmatpush1.xpose.msra.mxu0 0.0
    %774 = vmatprep.subr.mxu0 0.0
    %775 = vmatpush1.xpose.msra.mxu0 0.0
    %776 = vmatprep.subr.mxu0 0.0
    %777 = vmatpush1.xpose.msra.mxu0 0.0
    %778 = vmatprep.subr.mxu0 0.0
    %779 = vmatpush1.xpose.msra.mxu0 0.0
    %780 = vmatprep.subr.mxu0 0.0
    %781 = vmatpush1.xpose.msra.mxu0 0.0
    %782 = vmatprep.subr.mxu0 0.0
    %783 = vmatpush1.xpose.msra.mxu0 0.0
    %784 = vmatprep.subr.mxu0 0.0
    %785 = vmatpush1.xpose.msra.mxu0 0.0
    %786 = vmatprep.subr.mxu0 0.0
    %787 = vmatpush1.xpose.msra.mxu0 0.0
    %788 = vmatprep.subr.mxu0 0.0
    %789 = vmatpush1.xpose.msra.mxu0 0.0
    %790 = vmatprep.subr.mxu0 0.0
    %791 = vmatpush1.xpose.msra.mxu0 0.0
    %792 = vmatprep.subr.mxu0 0.0
    %793 = vmatpush1.xpose.msra.mxu0 0.0
    %794 = vmatprep.subr.mxu0 0.0
    %795 = vmatpush1.xpose.msra.mxu0 0.0
    %796 = vmatprep.subr.mxu0 0.0
    %797 = vmatpush1.xpose.msra.mxu0 0.0
    %798 = vmatprep.subr.mxu0 0.0
    %799 = vmatpush1.xpose.msra.mxu0 0.0
    %800 = vmatprep.subr.mxu0 0.0
    %801 = vmatpush1.xpose.msra.mxu0 0.0
    %802 = vmatprep.subr.mxu0 0.0
    %803 = vmatpush1.xpose.msra.mxu0 0.0
    %804 = vmatprep.subr.mxu0 0.0
    %805 = vmatpush1.xpose.msra.mxu0 0.0
    %806 = vmatprep.subr.mxu0 0.0
    %807 = vmatpush1.xpose.msra.mxu0 0.0
    %808 = vmatprep.subr.mxu0 0.0
    %809 = vmatpush1.xpose.msra.mxu0 0.0
    %810 = vmatprep.subr.mxu0 0.0
    %811 = vmatpush1.xpose.msra.mxu0 0.0
    %812 = vmatprep.subr.mxu0 0.0
    %813 = vmatpush1.xpose.msra.mxu0 0.0
    %814 = vmatprep.subr.mxu0 0.0
    %815 = vmatpush1.xpose.msra.mxu0 0.0
    %816 = vmatprep.subr.mxu0 0.0
    %817 = vmatpush1.xpose.msra.mxu0 0.0
    %818 = vmatprep.subr.mxu0 0.0
    %819 = vmatpush1.xpose.msra.mxu0 0.0
    %820 = vmatprep.subr.mxu0 0.0
    %821 = vmatpush1.xpose.msra.mxu0 0.0
    %822 = vmatprep.mubr.f32.mxu0 0.0
    %823 = vmatmul.mubr.f32.gmra.mrb[0].mxu0 %v747
    %v824 = vpop.f32.mrb[0].mxu0
    %v825 = vadd.f32 0.0, %v824
    %v826 = vpop.f32.mrb[0].mxu0
    %827 = vmatprep.mubr.f32.mxu0 0.0
    %828 = vmatmul.mubr.f32.gmra.mrb[0].mxu0 %v750
    %v829 = vpop.f32.mrb[0].mxu0
    %v830 = vadd.f32 0.0, %v829
    %v831 = vpop.f32.mrb[0].mxu0
    %832 = vdwg.mxu0
    %v834 = vsel %vm571, %v489, 0
    %v837 = vsel %vm571, %v490, 0
    %v840 = vsel %vm571, %v569, 0
    %v843 = vsel %vm571, %v570, 0
    %845 = vmatprep.subr.mxu0 0.0
    %846 = vmatpush1.xpose.msra.mxu0 %v840
    %847 = vmatprep.subr.mxu0 0.0
    %848 = vmatpush1.xpose.msra.mxu0 %v843
    %849 = vmatprep.subr.mxu0 0.0
    %850 = vmatpush1.xpose.msra.mxu0 0.0
    %851 = vmatprep.subr.mxu0 0.0
    %852 = vmatpush1.xpose.msra.mxu0 0.0
    %853 = vmatprep.subr.mxu0 0.0
    %854 = vmatpush1.xpose.msra.mxu0 0.0
    %855 = vmatprep.subr.mxu0 0.0
    %856 = vmatpush1.xpose.msra.mxu0 0.0
    %857 = vmatprep.subr.mxu0 0.0
    %858 = vmatpush1.xpose.msra.mxu0 0.0
    %859 = vmatprep.subr.mxu0 0.0
    %860 = vmatpush1.xpose.msra.mxu0 0.0
    %861 = vmatprep.subr.mxu0 0.0
    %862 = vmatpush1.xpose.msra.mxu0 0.0
    %863 = vmatprep.subr.mxu0 0.0
    %864 = vmatpush1.xpose.msra.mxu0 0.0
    %865 = vmatprep.subr.mxu0 0.0
    %866 = vmatpush1.xpose.msra.mxu0 0.0
    %867 = vmatprep.subr.mxu0 0.0
    %868 = vmatpush1.xpose.msra.mxu0 0.0
    %869 = vmatprep.subr.mxu0 0.0
    %870 = vmatpush1.xpose.msra.mxu0 0.0
    %871 = vmatprep.subr.mxu0 0.0
    %872 = vmatpush1.xpose.msra.mxu0 0.0
    %873 = vmatprep.subr.mxu0 0.0
    %874 = vmatpush1.xpose.msra.mxu0 0.0
    %875 = vmatprep.subr.mxu0 0.0
    %876 = vmatpush1.xpose.msra.mxu0 0.0
    %877 = vmatprep.subr.mxu0 0.0
    %878 = vmatpush1.xpose.msra.mxu0 0.0
    %879 = vmatprep.subr.mxu0 0.0
    %880 = vmatpush1.xpose.msra.mxu0 0.0
    %881 = vmatprep.subr.mxu0 0.0
    %882 = vmatpush1.xpose.msra.mxu0 0.0
    %883 = vmatprep.subr.mxu0 0.0
    %884 = vmatpush1.xpose.msra.mxu0 0.0
    %885 = vmatprep.subr.mxu0 0.0
    %886 = vmatpush1.xpose.msra.mxu0 0.0
    %887 = vmatprep.subr.mxu0 0.0
    %888 = vmatpush1.xpose.msra.mxu0 0.0
    %889 = vmatprep.subr.mxu0 0.0
    %890 = vmatpush1.xpose.msra.mxu0 0.0
    %891 = vmatprep.subr.mxu0 0.0
    %892 = vmatpush1.xpose.msra.mxu0 0.0
    %893 = vmatprep.subr.mxu0 0.0
    %894 = vmatpush1.xpose.msra.mxu0 0.0
    %895 = vmatprep.subr.mxu0 0.0
    %896 = vmatpush1.xpose.msra.mxu0 0.0
    %897 = vmatprep.subr.mxu0 0.0
    %898 = vmatpush1.xpose.msra.mxu0 0.0
    %899 = vmatprep.subr.mxu0 0.0
    %900 = vmatpush1.xpose.msra.mxu0 0.0
    %901 = vmatprep.subr.mxu0 0.0
    %902 = vmatpush1.xpose.msra.mxu0 0.0
    %903 = vmatprep.subr.mxu0 0.0
    %904 = vmatpush1.xpose.msra.mxu0 0.0
    %905 = vmatprep.subr.mxu0 0.0
    %906 = vmatpush1.xpose.msra.mxu0 0.0
    %907 = vmatprep.subr.mxu0 0.0
    %908 = vmatpush1.xpose.msra.mxu0 0.0
    %909 = vmatprep.mubr.f32.mxu0 0.0
    %910 = vmatmul.mubr.f32.gmra.mrb[0].mxu0 %v834
    %v911 = vpop.f32.mrb[0].mxu0
    %v912 = vadd.f32 0.0, %v911
    %v913 = vpop.f32.mrb[0].mxu0
    %914 = vmatprep.mubr.f32.mxu0 0.0
    %915 = vmatmul.mubr.f32.gmra.mrb[0].mxu0 %v837
    %v916 = vpop.f32.mrb[0].mxu0
    %v917 = vadd.f32 0.0, %v916
    %v918 = vpop.f32.mrb[0].mxu0
    %919 = vdwg.mxu0
    %v920 = vmul.f32 %v651, 0.35355338
    %v921 = vmul.f32 %v656, 0.35355338
    %v922 = vmul.f32 %v738, 0.35355338
    %v923 = vmul.f32 %v743, 0.35355338
    %v924 = vmul.f32 %v825, 0.35355338
    %v925 = vmul.f32 %v830, 0.35355338
    %v926 = vmul.f32 %v912, 0.35355338
    %v927 = vmul.f32 %v917, 0.35355338
    %vm928 = vcmask 130048
    %v929 = vsel %vm928, %v920, -inf
    %930 = vmax.xlane.f32.xlu0 %v929
    %v931 = vpop.xlane.xlu0 %930
    %v932 = vsel %vm928, %v921, -inf
    %933 = vmax.xlane.f32.xlu0 %v932
    %v934 = vpop.xlane.xlu0 %933
    %v935 = vsel %vm928, %v922, -inf
    %936 = vmax.xlane.f32.xlu0 %v935
    %v937 = vpop.xlane.xlu0 %936
    %v938 = vsel %vm928, %v923, -inf
    %939 = vmax.xlane.f32.xlu0 %v938
    %v940 = vpop.xlane.xlu0 %939
    %v941 = vsel %vm928, %v924, -inf
    %942 = vmax.xlane.f32.xlu0 %v941
    %v943 = vpop.xlane.xlu0 %942
    %v944 = vsel %vm928, %v925, -inf
    %945 = vmax.xlane.f32.xlu0 %v944
    %v946 = vpop.xlane.xlu0 %945
    %v947 = vsel %vm928, %v926, -inf
    %948 = vmax.xlane.f32.xlu0 %v947
    %v949 = vpop.xlane.xlu0 %948
    %v950 = vsel %vm928, %v927, -inf
    %951 = vmax.xlane.f32.xlu0 %v950
    %v952 = vpop.xlane.xlu0 %951
    %v953 = vsub.f32 %v920, %v931
    %v954 = vsub.f32 %v921, %v934
    %v955 = vsub.f32 %v922, %v937
    %v956 = vsub.f32 %v923, %v940
    %v957 = vsub.f32 %v924, %v943
    %v958 = vsub.f32 %v925, %v946
    %v959 = vsub.f32 %v926, %v949
    %v960 = vsub.f32 %v927, %v952
    %v961 = vmul.f32 %v953, 1.442695
    %v962 = vpow.pop %v961
    %v963 = vmul.f32 %v954, 1.442695
    %v964 = vpow.pop %v963
    %v965 = vmul.f32 %v955, 1.442695
    %v966 = vpow.pop %v965
    %v967 = vmul.f32 %v956, 1.442695
    %v968 = vpow.pop %v967
    %v969 = vmul.f32 %v957, 1.442695
    %v970 = vpow.pop %v969
    %v971 = vmul.f32 %v958, 1.442695
    %v972 = vpow.pop %v971
    %v973 = vmul.f32 %v959, 1.442695
    %v974 = vpow.pop %v973
    %v975 = vmul.f32 %v960, 1.442695
    %v976 = vpow.pop %v975
    %v977 = vsel %vm928, %v962, 0.0
    %978 = vadd.xlane.f32.xlu0 %v977
    %v979 = vpop.xlane.xlu0 %978
    %v980 = vsel %vm928, %v964, 0.0
    %981 = vadd.xlane.f32.xlu0 %v980
    %v982 = vpop.xlane.xlu0 %981
    %v983 = vsel %vm928, %v966, 0.0
    %984 = vadd.xlane.f32.xlu0 %v983
    %v985 = vpop.xlane.xlu0 %984
    %v986 = vsel %vm928, %v968, 0.0
    %987 = vadd.xlane.f32.xlu0 %v986
    %v988 = vpop.xlane.xlu0 %987
    %v989 = vsel %vm928, %v970, 0.0
    %990 = vadd.xlane.f32.xlu0 %v989
    %v991 = vpop.xlane.xlu0 %990
    %v992 = vsel %vm928, %v972, 0.0
    %993 = vadd.xlane.f32.xlu0 %v992
    %v994 = vpop.xlane.xlu0 %993
    %v995 = vsel %vm928, %v974, 0.0
    %996 = vadd.xlane.f32.xlu0 %v995
    %v997 = vpop.xlane.xlu0 %996
    %v998 = vsel %vm928, %v976, 0.0
    %999 = vadd.xlane.f32.xlu0 %v998
    %v1000 = vpop.xlane.xlu0 %999
    %v1001 = vrcp.pop %v979
    %v1002 = vrcp.pop %v982
    %v1003 = vrcp.pop %v985
    %v1004 = vrcp.pop %v988
    %v1005 = vrcp.pop %v991
    %v1006 = vrcp.pop %v994
    %v1007 = vrcp.pop %v997
    %v1008 = vrcp.pop %v1000
    %v1009 = vmul.f32 %v962, %v1001
    %v1010 = vmul.f32 %v964, %v1002
    %v1011 = vmul.f32 %v966, %v1003
    %v1012 = vmul.f32 %v968, %v1004
    %v1013 = vmul.f32 %v970, %v1005
    %v1014 = vmul.f32 %v972, %v1006
    %v1015 = vmul.f32 %v974, %v1007
    %v1016 = vmul.f32 %v976, %v1008
    %1017 = vst.msk [vmem:[#allocation8] sm:$0xff] %vm928, %v1009
    %1018 = vst.msk [vmem:[#allocation8 + $0x8] sm:$0xff] %vm928, %v1010
    %1019 = vst.msk [vmem:[#allocation8 + $0x10] sm:$0xff] %vm928, %v1011
    %1020 = vst.msk [vmem:[#allocation8 + $0x18] sm:$0xff] %vm928, %v1012
    %1021 = vst.msk [vmem:[#allocation8 + $0x20] sm:$0xff] %vm928, %v1013
    %1022 = vst.msk [vmem:[#allocation8 + $0x28] sm:$0xff] %vm928, %v1014
    %1023 = vst.msk [vmem:[#allocation8 + $0x30] sm:$0xff] %vm928, %v1015
    %1024 = vst.msk [vmem:[#allocation8 + $0x38] sm:$0xff] %vm928, %v1016
    %v1026 = vsel %vm928, %v1009, 0
    %v1029 = vsel %vm928, %v1010, 0
    %1031 = vmatprep.subr.mxu0 0.0
    %1032 = vmatpush1.msra.mxu0 %v342
    %1033 = vmatprep.subr.mxu0 0.0
    %1034 = vmatpush1.msra.mxu0 %v347
    %1035 = vmatprep.subr.mxu0 0.0
    %1036 = vmatpush1.msra.mxu0 0.0
    %1037 = vmatprep.subr.mxu0 0.0
    %1038 = vmatpush1.msra.mxu0 0.0
    %1039 = vmatprep.subr.mxu0 0.0
    %1040 = vmatpush1.msra.mxu0 0.0
    %1041 = vmatprep.subr.mxu0 0.0
    %1042 = vmatpush1.msra.mxu0 0.0
    %1043 = vmatprep.subr.mxu0 0.0
    %1044 = vmatpush1.msra.mxu0 0.0
    %1045 = vmatprep.subr.mxu0 0.0
    %1046 = vmatpush1.msra.mxu0 0.0
    %1047 = vmatprep.subr.mxu0 0.0
    %1048 = vmatpush1.msra.mxu0 0.0
    %1049 = vmatprep.subr.mxu0 0.0
    %1050 = vmatpush1.msra.mxu0 0.0
    %1051 = vmatprep.subr.mxu0 0.0
    %1052 = vmatpush1.msra.mxu0 0.0
    %1053 = vmatprep.subr.mxu0 0.0
    %1054 = vmatpush1.msra.mxu0 0.0
    %1055 = vmatprep.subr.mxu0 0.0
    %1056 = vmatpush1.msra.mxu0 0.0
    %1057 = vmatprep.subr.mxu0 0.0
    %1058 = vmatpush1.msra.mxu0 0.0
    %1059 = vmatprep.subr.mxu0 0.0
    %1060 = vmatpush1.msra.mxu0 0.0
    %1061 = vmatprep.subr.mxu0 0.0
    %1062 = vmatpush1.msra.mxu0 0.0
    %1063 = vmatprep.subr.mxu0 0.0
    %1064 = vmatpush1.msra.mxu0 0.0
    %1065 = vmatprep.subr.mxu0 0.0
    %1066 = vmatpush1.msra.mxu0 0.0
    %1067 = vmatprep.subr.mxu0 0.0
    %1068 = vmatpush1.msra.mxu0 0.0
    %1069 = vmatprep.subr.mxu0 0.0
    %1070 = vmatpush1.msra.mxu0 0.0
    %1071 = vmatprep.subr.mxu0 0.0
    %1072 = vmatpush1.msra.mxu0 0.0
    %1073 = vmatprep.subr.mxu0 0.0
    %1074 = vmatpush1.msra.mxu0 0.0
    %1075 = vmatprep.subr.mxu0 0.0
    %1076 = vmatpush1.msra.mxu0 0.0
    %1077 = vmatprep.subr.mxu0 0.0
    %1078 = vmatpush1.msra.mxu0 0.0
    %1079 = vmatprep.subr.mxu0 0.0
    %1080 = vmatpush1.msra.mxu0 0.0
    %1081 = vmatprep.subr.mxu0 0.0
    %1082 = vmatpush1.msra.mxu0 0.0
    %1083 = vmatprep.subr.mxu0 0.0
    %1084 = vmatpush1.msra.mxu0 0.0
    %1085 = vmatprep.subr.mxu0 0.0
    %1086 = vmatpush1.msra.mxu0 0.0
    %1087 = vmatprep.subr.mxu0 0.0
    %1088 = vmatpush1.msra.mxu0 0.0
    %1089 = vmatprep.subr.mxu0 0.0
    %1090 = vmatpush1.msra.mxu0 0.0
    %1091 = vmatprep.subr.mxu0 0.0
    %1092 = vmatpush1.msra.mxu0 0.0
    %1093 = vmatprep.subr.mxu0 0.0
    %1094 = vmatpush1.msra.mxu0 0.0
    %1095 = vmatprep.mubr.f32.mxu0 0.0
    %1096 = vmatmul.mubr.f32.gmra.mrb[0].mxu0 %v1026
    %v1097 = vpop.f32.mrb[0].mxu0
    %v1098 = vadd.f32 0.0, %v1097
    %v1099 = vpop.f32.mrb[0].mxu0
    %1100 = vmatprep.mubr.f32.mxu0 0.0
    %1101 = vmatmul.mubr.f32.gmra.mrb[0].mxu0 %v1029
    %v1102 = vpop.f32.mrb[0].mxu0
    %v1103 = vadd.f32 0.0, %v1102
    %v1104 = vpop.f32.mrb[0].mxu0
    %1105 = vdwg.mxu0
    %v1107 = vsel %vm928, %v1011, 0
    %v1110 = vsel %vm928, %v1012, 0
    %1112 = vmatprep.subr.mxu0 0.0
    %1113 = vmatpush1.msra.mxu0 %v393
    %1114 = vmatprep.subr.mxu0 0.0
    %1115 = vmatpush1.msra.mxu0 %v395
    %1116 = vmatprep.subr.mxu0 0.0
    %1117 = vmatpush1.msra.mxu0 0.0
    %1118 = vmatprep.subr.mxu0 0.0
    %1119 = vmatpush1.msra.mxu0 0.0
    %1120 = vmatprep.subr.mxu0 0.0
    %1121 = vmatpush1.msra.mxu0 0.0
    %1122 = vmatprep.subr.mxu0 0.0
    %1123 = vmatpush1.msra.mxu0 0.0
    %1124 = vmatprep.subr.mxu0 0.0
    %1125 = vmatpush1.msra.mxu0 0.0
    %1126 = vmatprep.subr.mxu0 0.0
    %1127 = vmatpush1.msra.mxu0 0.0
    %1128 = vmatprep.subr.mxu0 0.0
    %1129 = vmatpush1.msra.mxu0 0.0
    %1130 = vmatprep.subr.mxu0 0.0
    %1131 = vmatpush1.msra.mxu0 0.0
    %1132 = vmatprep.subr.mxu0 0.0
    %1133 = vmatpush1.msra.mxu0 0.0
    %1134 = vmatprep.subr.mxu0 0.0
    %1135 = vmatpush1.msra.mxu0 0.0
    %1136 = vmatprep.subr.mxu0 0.0
    %1137 = vmatpush1.msra.mxu0 0.0
    %1138 = vmatprep.subr.mxu0 0.0
    %1139 = vmatpush1.msra.mxu0 0.0
    %1140 = vmatprep.subr.mxu0 0.0
    %1141 = vmatpush1.msra.mxu0 0.0
    %1142 = vmatprep.subr.mxu0 0.0
    %1143 = vmatpush1.msra.mxu0 0.0
    %1144 = vmatprep.subr.mxu0 0.0
    %1145 = vmatpush1.msra.mxu0 0.0
    %1146 = vmatprep.subr.mxu0 0.0
    %1147 = vmatpush1.msra.mxu0 0.0
    %1148 = vmatprep.subr.mxu0 0.0
    %1149 = vmatpush1.msra.mxu0 0.0
    %1150 = vmatprep.subr.mxu0 0.0
    %1151 = vmatpush1.msra.mxu0 0.0
    %1152 = vmatprep.subr.mxu0 0.0
    %1153 = vmatpush1.msra.mxu0 0.0
    %1154 = vmatprep.subr.mxu0 0.0
    %1155 = vmatpush1.msra.mxu0 0.0
    %1156 = vmatprep.subr.mxu0 0.0
    %1157 = vmatpush1.msra.mxu0 0.0
    %1158 = vmatprep.subr.mxu0 0.0
    %1159 = vmatpush1.msra.mxu0 0.0
    %1160 = vmatprep.subr.mxu0 0.0
    %1161 = vmatpush1.msra.mxu0 0.0
    %1162 = vmatprep.subr.mxu0 0.0
    %1163 = vmatpush1.msra.mxu0 0.0
    %1164 = vmatprep.subr.mxu0 0.0
    %1165 = vmatpush1.msra.mxu0 0.0
    %1166 = vmatprep.subr.mxu0 0.0
    %1167 = vmatpush1.msra.mxu0 0.0
    %1168 = vmatprep.subr.mxu0 0.0
    %1169 = vmatpush1.msra.mxu0 0.0
    %1170 = vmatprep.subr.mxu0 0.0
    %1171 = vmatpush1.msra.mxu0 0.0
    %1172 = vmatprep.subr.mxu0 0.0
    %1173 = vmatpush1.msra.mxu0 0.0
    %1174 = vmatprep.subr.mxu0 0.0
    %1175 = vmatpush1.msra.mxu0 0.0
    %1176 = vmatprep.mubr.f32.mxu0 0.0
    %1177 = vmatmul.mubr.f32.gmra.mrb[0].mxu0 %v1107
    %v1178 = vpop.f32.mrb[0].mxu0
    %v1179 = vadd.f32 0.0, %v1178
    %v1180 = vpop.f32.mrb[0].mxu0
    %1181 = vmatprep.mubr.f32.mxu0 0.0
    %1182 = vmatmul.mubr.f32.gmra.mrb[0].mxu0 %v1110
    %v1183 = vpop.f32.mrb[0].mxu0
    %v1184 = vadd.f32 0.0, %v1183
    %v1185 = vpop.f32.mrb[0].mxu0
    %1186 = vdwg.mxu0
    %v1188 = vsel %vm928, %v1013, 0
    %v1191 = vsel %vm928, %v1014, 0
    %1193 = vmatprep.subr.mxu0 0.0
    %1194 = vmatpush1.msra.mxu0 %v399
    %1195 = vmatprep.subr.mxu0 0.0
    %1196 = vmatpush1.msra.mxu0 %v401
    %1197 = vmatprep.subr.mxu0 0.0
    %1198 = vmatpush1.msra.mxu0 0.0
    %1199 = vmatprep.subr.mxu0 0.0
    %1200 = vmatpush1.msra.mxu0 0.0
    %1201 = vmatprep.subr.mxu0 0.0
    %1202 = vmatpush1.msra.mxu0 0.0
    %1203 = vmatprep.subr.mxu0 0.0
    %1204 = vmatpush1.msra.mxu0 0.0
    %1205 = vmatprep.subr.mxu0 0.0
    %1206 = vmatpush1.msra.mxu0 0.0
    %1207 = vmatprep.subr.mxu0 0.0
    %1208 = vmatpush1.msra.mxu0 0.0
    %1209 = vmatprep.subr.mxu0 0.0
    %1210 = vmatpush1.msra.mxu0 0.0
    %1211 = vmatprep.subr.mxu0 0.0
    %1212 = vmatpush1.msra.mxu0 0.0
    %1213 = vmatprep.subr.mxu0 0.0
    %1214 = vmatpush1.msra.mxu0 0.0
    %1215 = vmatprep.subr.mxu0 0.0
    %1216 = vmatpush1.msra.mxu0 0.0
    %1217 = vmatprep.subr.mxu0 0.0
    %1218 = vmatpush1.msra.mxu0 0.0
    %1219 = vmatprep.subr.mxu0 0.0
    %1220 = vmatpush1.msra.mxu0 0.0
    %1221 = vmatprep.subr.mxu0 0.0
    %1222 = vmatpush1.msra.mxu0 0.0
    %1223 = vmatprep.subr.mxu0 0.0
    %1224 = vmatpush1.msra.mxu0 0.0
    %1225 = vmatprep.subr.mxu0 0.0
    %1226 = vmatpush1.msra.mxu0 0.0
    %1227 = vmatprep.subr.mxu0 0.0
    %1228 = vmatpush1.msra.mxu0 0.0
    %1229 = vmatprep.subr.mxu0 0.0
    %1230 = vmatpush1.msra.mxu0 0.0
    %1231 = vmatprep.subr.mxu0 0.0
    %1232 = vmatpush1.msra.mxu0 0.0
    %1233 = vmatprep.subr.mxu0 0.0
    %1234 = vmatpush1.msra.mxu0 0.0
    %1235 = vmatprep.subr.mxu0 0.0
    %1236 = vmatpush1.msra.mxu0 0.0
    %1237 = vmatprep.subr.mxu0 0.0
    %1238 = vmatpush1.msra.mxu0 0.0
    %1239 = vmatprep.subr.mxu0 0.0
    %1240 = vmatpush1.msra.mxu0 0.0
    %1241 = vmatprep.subr.mxu0 0.0
    %1242 = vmatpush1.msra.mxu0 0.0
    %1243 = vmatprep.subr.mxu0 0.0
    %1244 = vmatpush1.msra.mxu0 0.0
    %1245 = vmatprep.subr.mxu0 0.0
    %1246 = vmatpush1.msra.mxu0 0.0
    %1247 = vmatprep.subr.mxu0 0.0
    %1248 = vmatpush1.msra.mxu0 0.0
    %1249 = vmatprep.subr.mxu0 0.0
    %1250 = vmatpush1.msra.mxu0 0.0
    %1251 = vmatprep.subr.mxu0 0.0
    %1252 = vmatpush1.msra.mxu0 0.0
    %1253 = vmatprep.subr.mxu0 0.0
    %1254 = vmatpush1.msra.mxu0 0.0
    %1255 = vmatprep.subr.mxu0 0.0
    %1256 = vmatpush1.msra.mxu0 0.0
    %1257 = vmatprep.mubr.f32.mxu0 0.0
    %1258 = vmatmul.mubr.f32.gmra.mrb[0].mxu0 %v1188
    %v1259 = vpop.f32.mrb[0].mxu0
    %v1260 = vadd.f32 0.0, %v1259
    %v1261 = vpop.f32.mrb[0].mxu0
    %1262 = vmatprep.mubr.f32.mxu0 0.0
    %1263 = vmatmul.mubr.f32.gmra.mrb[0].mxu0 %v1191
    %v1264 = vpop.f32.mrb[0].mxu0
    %v1265 = vadd.f32 0.0, %v1264
    %v1266 = vpop.f32.mrb[0].mxu0
    %1267 = vdwg.mxu0
    %v1269 = vsel %vm928, %v1015, 0
    %v1272 = vsel %vm928, %v1016, 0
    %1274 = vmatprep.subr.mxu0 0.0
    %1275 = vmatpush1.msra.mxu0 %v405
    %1276 = vmatprep.subr.mxu0 0.0
    %1277 = vmatpush1.msra.mxu0 %v407
    %1278 = vmatprep.subr.mxu0 0.0
    %1279 = vmatpush1.msra.mxu0 0.0
    %1280 = vmatprep.subr.mxu0 0.0
    %1281 = vmatpush1.msra.mxu0 0.0
    %1282 = vmatprep.subr.mxu0 0.0
    %1283 = vmatpush1.msra.mxu0 0.0
    %1284 = vmatprep.subr.mxu0 0.0
    %1285 = vmatpush1.msra.mxu0 0.0
    %1286 = vmatprep.subr.mxu0 0.0
    %1287 = vmatpush1.msra.mxu0 0.0
    %1288 = vmatprep.subr.mxu0 0.0
    %1289 = vmatpush1.msra.mxu0 0.0
    %1290 = vmatprep.subr.mxu0 0.0
    %1291 = vmatpush1.msra.mxu0 0.0
    %1292 = vmatprep.subr.mxu0 0.0
    %1293 = vmatpush1.msra.mxu0 0.0
    %1294 = vmatprep.subr.mxu0 0.0
    %1295 = vmatpush1.msra.mxu0 0.0
    %1296 = vmatprep.subr.mxu0 0.0
    %1297 = vmatpush1.msra.mxu0 0.0
    %1298 = vmatprep.subr.mxu0 0.0
    %1299 = vmatpush1.msra.mxu0 0.0
    %1300 = vmatprep.subr.mxu0 0.0
    %1301 = vmatpush1.msra.mxu0 0.0
    %1302 = vmatprep.subr.mxu0 0.0
    %1303 = vmatpush1.msra.mxu0 0.0
    %1304 = vmatprep.subr.mxu0 0.0
    %1305 = vmatpush1.msra.mxu0 0.0
    %1306 = vmatprep.subr.mxu0 0.0
    %1307 = vmatpush1.msra.mxu0 0.0
    %1308 = vmatprep.subr.mxu0 0.0
    %1309 = vmatpush1.msra.mxu0 0.0
    %1310 = vmatprep.subr.mxu0 0.0
    %1311 = vmatpush1.msra.mxu0 0.0
    %1312 = vmatprep.subr.mxu0 0.0
    %1313 = vmatpush1.msra.mxu0 0.0
    %1314 = vmatprep.subr.mxu0 0.0
    %1315 = vmatpush1.msra.mxu0 0.0
    %1316 = vmatprep.subr.mxu0 0.0
    %1317 = vmatpush1.msra.mxu0 0.0
    %1318 = vmatprep.subr.mxu0 0.0
    %1319 = vmatpush1.msra.mxu0 0.0
    %1320 = vmatprep.subr.mxu0 0.0
    %1321 = vmatpush1.msra.mxu0 0.0
    %1322 = vmatprep.subr.mxu0 0.0
    %1323 = vmatpush1.msra.mxu0 0.0
    %1324 = vmatprep.subr.mxu0 0.0
    %1325 = vmatpush1.msra.mxu0 0.0
    %1326 = vmatprep.subr.mxu0 0.0
    %1327 = vmatpush1.msra.mxu0 0.0
    %1328 = vmatprep.subr.mxu0 0.0
    %1329 = vmatpush1.msra.mxu0 0.0
    %1330 = vmatprep.subr.mxu0 0.0
    %1331 = vmatpush1.msra.mxu0 0.0
    %1332 = vmatprep.subr.mxu0 0.0
    %1333 = vmatpush1.msra.mxu0 0.0
    %1334 = vmatprep.subr.mxu0 0.0
    %1335 = vmatpush1.msra.mxu0 0.0
    %1336 = vmatprep.subr.mxu0 0.0
    %1337 = vmatpush1.msra.mxu0 0.0
    %1338 = vmatprep.mubr.f32.mxu0 0.0
    %1339 = vmatmul.mubr.f32.gmra.mrb[0].mxu0 %v1269
    %v1340 = vpop.f32.mrb[0].mxu0
    %v1341 = vadd.f32 0.0, %v1340
    %v1342 = vpop.f32.mrb[0].mxu0
    %1343 = vmatprep.mubr.f32.mxu0 0.0
    %1344 = vmatmul.mubr.f32.gmra.mrb[0].mxu0 %v1272
    %v1345 = vpop.f32.mrb[0].mxu0
    %v1346 = vadd.f32 0.0, %v1345
    %v1347 = vpop.f32.mrb[0].mxu0
    %1348 = vdwg.mxu0
    %1351 = vrot.lane.b32.xlu0 %v1179, 8
    %v1352 = vpop.permute.xlu0 %1351
    %1353 = vrot.lane.b32.xlu0 %v1184, 8
    %v1354 = vpop.permute.xlu0 %1353
    %1359 = vrot.lane.b32.xlu0 %v1260, 16
    %v1360 = vpop.permute.xlu0 %1359
    %1361 = vrot.lane.b32.xlu0 %v1265, 16
    %v1362 = vpop.permute.xlu0 %1361
    %1367 = vrot.lane.b32.xlu0 %v1341, 24
    %v1368 = vpop.permute.xlu0 %1367
    %1369 = vrot.lane.b32.xlu0 %v1346, 24
    %v1370 = vpop.permute.xlu0 %1369
    %v1373 = vsel %vm571, %v1098, %v1352
    %v1374 = vsel %vm571, %v1103, %v1354
    %v1375 = vsel %vm928, %v1373, %v1360
    %v1376 = vsel %vm928, %v1374, %v1362
    %vm1377 = vcmask 195584
    %v1378 = vsel %vm1377, %v1375, %v1368
    %v1379 = vsel %vm1377, %v1376, %v1370
    %s1380 = scalar_lea.vmem %s3, 96
    %v1381 = vld [vmem:[%s1380] sm:$0xff]
    %v1382 = vld [vmem:[%s1380 + $0x8] sm:$0xff]
    %v1383 = vld [vmem:[%s1380 + $0x10] sm:$0xff]
    %v1384 = vld [vmem:[%s1380 + $0x18] sm:$0xff]
    %v1385 = vlaneseq
    %v1386 = vshrl.u32 %v1385, 7
    %v1387 = vsub.s32 0, %v1386
    %v1388 = vrot.slane %v79, %v1387
    %v1390 = vsel %vm94, %v1378, 0
    %v1393 = vsel %vm94, %v1379, 0
    %1395 = vmatprep.subr.mxu0 0.0
    %1396 = vmatpush1.msra.mxu0 %v1381
    %1397 = vmatprep.subr.mxu0 0.0
    %1398 = vmatpush1.msra.mxu0 %v1382
    %1399 = vmatprep.subr.mxu0 0.0
    %1400 = vmatpush1.msra.mxu0 %v1383
    %1401 = vmatprep.subr.mxu0 0.0
    %1402 = vmatpush1.msra.mxu0 %v1384
    %1403 = vmatprep.subr.mxu0 0.0
    %1404 = vmatpush1.msra.mxu0 0.0
    %1405 = vmatprep.subr.mxu0 0.0
    %1406 = vmatpush1.msra.mxu0 0.0
    %1407 = vmatprep.subr.mxu0 0.0
    %1408 = vmatpush1.msra.mxu0 0.0
    %1409 = vmatprep.subr.mxu0 0.0
    %1410 = vmatpush1.msra.mxu0 0.0
    %1411 = vmatprep.subr.mxu0 0.0
    %1412 = vmatpush1.msra.mxu0 0.0
    %1413 = vmatprep.subr.mxu0 0.0
    %1414 = vmatpush1.msra.mxu0 0.0
    %1415 = vmatprep.subr.mxu0 0.0
    %1416 = vmatpush1.msra.mxu0 0.0
    %1417 = vmatprep.subr.mxu0 0.0
    %1418 = vmatpush1.msra.mxu0 0.0
    %1419 = vmatprep.subr.mxu0 0.0
    %1420 = vmatpush1.msra.mxu0 0.0
    %1421 = vmatprep.subr.mxu0 0.0
    %1422 = vmatpush1.msra.mxu0 0.0
    %1423 = vmatprep.subr.mxu0 0.0
    %1424 = vmatpush1.msra.mxu0 0.0
    %1425 = vmatprep.subr.mxu0 0.0
    %1426 = vmatpush1.msra.mxu0 0.0
    %1427 = vmatprep.subr.mxu0 0.0
    %1428 = vmatpush1.msra.mxu0 0.0
    %1429 = vmatprep.subr.mxu0 0.0
    %1430 = vmatpush1.msra.mxu0 0.0
    %1431 = vmatprep.subr.mxu0 0.0
    %1432 = vmatpush1.msra.mxu0 0.0
    %1433 = vmatprep.subr.mxu0 0.0
    %1434 = vmatpush1.msra.mxu0 0.0
    %1435 = vmatprep.subr.mxu0 0.0
    %1436 = vmatpush1.msra.mxu0 0.0
    %1437 = vmatprep.subr.mxu0 0.0
    %1438 = vmatpush1.msra.mxu0 0.0
    %1439 = vmatprep.subr.mxu0 0.0
    %1440 = vmatpush1.msra.mxu0 0.0
    %1441 = vmatprep.subr.mxu0 0.0
    %1442 = vmatpush1.msra.mxu0 0.0
    %1443 = vmatprep.subr.mxu0 0.0
    %1444 = vmatpush1.msra.mxu0 0.0
    %1445 = vmatprep.subr.mxu0 0.0
    %1446 = vmatpush1.msra.mxu0 0.0
    %1447 = vmatprep.subr.mxu0 0.0
    %1448 = vmatpush1.msra.mxu0 0.0
    %1449 = vmatprep.subr.mxu0 0.0
    %1450 = vmatpush1.msra.mxu0 0.0
    %1451 = vmatprep.subr.mxu0 0.0
    %1452 = vmatpush1.msra.mxu0 0.0
    %1453 = vmatprep.subr.mxu0 0.0
    %1454 = vmatpush1.msra.mxu0 0.0
    %1455 = vmatprep.subr.mxu0 0.0
    %1456 = vmatpush1.msra.mxu0 0.0
    %1457 = vmatprep.subr.mxu0 0.0
    %1458 = vmatpush1.msra.mxu0 0.0
    %1459 = vmatprep.mubr.f32.mxu0 0.0
    %1460 = vmatmul.mubr.f32.gmra.mrb[0].mxu0 %v1390
    %v1461 = vpop.f32.mrb[0].mxu0
    %v1462 = vadd.f32 %v1388, %v1461
    %v1463 = vpop.f32.mrb[0].mxu0
    %1464 = vmatprep.mubr.f32.mxu0 0.0
    %1465 = vmatmul.mubr.f32.gmra.mrb[0].mxu0 %v1393
    %v1466 = vpop.f32.mrb[0].mxu0
    %v1467 = vadd.f32 %v1388, %v1466
    %v1468 = vpop.f32.mrb[0].mxu0
    %1469 = vdwg.mxu0
    %v1470 = vadd.f32 %v1462, %v55
    %v1471 = vadd.f32 %v1467, %v56
    %v1472 = vsel %vm94, %v1470, 0.0
    %1473 = vadd.xlane.f32.xlu0 %v1472
    %v1474 = vpop.xlane.xlu0 %1473
    %v1475 = vsel %vm94, %v1471, 0.0
    %1476 = vadd.xlane.f32.xlu0 %v1475
    %v1477 = vpop.xlane.xlu0 %1476
    %v1478 = vrcp.pop 32.0
    %v1479 = vmul.f32 %v1474, %v1478
    %v1480 = vmul.f32 %v1477, %v1478
    %v1481 = vsub.f32 %v1470, %v1479
    %v1482 = vsub.f32 %v1471, %v1480
    %v1483 = vmul.f32 %v1481, %v1481
    %v1484 = vmul.f32 %v1482, %v1482
    %v1485 = vsel %vm94, %v1483, 0.0
    %1486 = vadd.xlane.f32.xlu0 %v1485
    %v1487 = vpop.xlane.xlu0 %1486
    %v1488 = vsel %vm94, %v1484, 0.0
    %1489 = vadd.xlane.f32.xlu0 %v1488
    %v1490 = vpop.xlane.xlu0 %1489
    %v1491 = vmul.f32 %v1487, %v1478
    %v1492 = vmul.f32 %v1490, %v1478
    %v1493 = vadd.f32 %v1491, 1e-05
    %v1494 = vadd.f32 %v1492, 1e-05
    %v1495 = vrsqrt.pop %v1493
    %v1496 = vrsqrt.pop %v1494
    %v1497 = vmul.f32 %v1481, %v1495
    %v1498 = vmul.f32 %v1482, %v1496
    %v1499 = vlaneseq
    %v1500 = vshrl.u32 %v1499, 7
    %v1501 = vsub.s32 0, %v1500
    %v1502 = vrot.slane %v80, %v1501
    %v1503 = vmul.f32 %v1497, %v1502
    %v1504 = vmul.f32 %v1498, %v1502
    %v1505 = vlaneseq
    %v1506 = vshrl.u32 %v1505, 7
    %v1507 = vsub.s32 0, %v1506
    %v1508 = vrot.slane %v81, %v1507
    %v1509 = vadd.f32 %v1503, %v1508
    %v1510 = vadd.f32 %v1504, %v1508
    %v1511 = vld [vmem:[%s4] sm:$0xff]
    %v1512 = vld [vmem:[%s4 + $0x8] sm:$0xff]
    %v1513 = vld [vmem:[%s4 + $0x10] sm:$0xff]
    %v1514 = vld [vmem:[%s4 + $0x18] sm:$0xff]
    %v1515 = vlaneseq
    %v1516 = vshrl.u32 %v1515, 7
    %v1517 = vsub.s32 0, %v1516
    %v1518 = vrot.slane %v85, %v1517
    %v1520 = vsel %vm94, %v1509, 0
    %v1523 = vsel %vm94, %v1510, 0
    %1525 = vmatprep.subr.mxu0 0.0
    %1526 = vmatpush1.msra.mxu0 %v1511
    %1527 = vmatprep.subr.mxu0 0.0
    %1528 = vmatpush1.msra.mxu0 %v1512
    %1529 = vmatprep.subr.mxu0 0.0
    %1530 = vmatpush1.msra.mxu0 %v1513
    %1531 = vmatprep.subr.mxu0 0.0
    %1532 = vmatpush1.msra.mxu0 %v1514
    %1533 = vmatprep.subr.mxu0 0.0
    %1534 = vmatpush1.msra.mxu0 0.0
    %1535 = vmatprep.subr.mxu0 0.0
    %1536 = vmatpush1.msra.mxu0 0.0
    %1537 = vmatprep.subr.mxu0 0.0
    %1538 = vmatpush1.msra.mxu0 0.0
    %1539 = vmatprep.subr.mxu0 0.0
    %1540 = vmatpush1.msra.mxu0 0.0
    %1541 = vmatprep.subr.mxu0 0.0
    %1542 = vmatpush1.msra.mxu0 0.0
    %1543 = vmatprep.subr.mxu0 0.0
    %1544 = vmatpush1.msra.mxu0 0.0
    %1545 = vmatprep.subr.mxu0 0.0
    %1546 = vmatpush1.msra.mxu0 0.0
    %1547 = vmatprep.subr.mxu0 0.0
    %1548 = vmatpush1.msra.mxu0 0.0
    %1549 = vmatprep.subr.mxu0 0.0
    %1550 = vmatpush1.msra.mxu0 0.0
    %1551 = vmatprep.subr.mxu0 0.0
    %1552 = vmatpush1.msra.mxu0 0.0
    %1553 = vmatprep.subr.mxu0 0.0
    %1554 = vmatpush1.msra.mxu0 0.0
    %1555 = vmatprep.subr.mxu0 0.0
    %1556 = vmatpush1.msra.mxu0 0.0
    %1557 = vmatprep.subr.mxu0 0.0
    %1558 = vmatpush1.msra.mxu0 0.0
    %1559 = vmatprep.subr.mxu0 0.0
    %1560 = vmatpush1.msra.mxu0 0.0
    %1561 = vmatprep.subr.mxu0 0.0
    %1562 = vmatpush1.msra.mxu0 0.0
    %1563 = vmatprep.subr.mxu0 0.0
    %1564 = vmatpush1.msra.mxu0 0.0
    %1565 = vmatprep.subr.mxu0 0.0
    %1566 = vmatpush1.msra.mxu0 0.0
    %1567 = vmatprep.subr.mxu0 0.0
    %1568 = vmatpush1.msra.mxu0 0.0
    %1569 = vmatprep.subr.mxu0 0.0
    %1570 = vmatpush1.msra.mxu0 0.0
    %1571 = vmatprep.subr.mxu0 0.0
    %1572 = vmatpush1.msra.mxu0 0.0
    %1573 = vmatprep.subr.mxu0 0.0
    %1574 = vmatpush1.msra.mxu0 0.0
    %1575 = vmatprep.subr.mxu0 0.0
    %1576 = vmatpush1.msra.mxu0 0.0
    %1577 = vmatprep.subr.mxu0 0.0
    %1578 = vmatpush1.msra.mxu0 0.0
    %1579 = vmatprep.subr.mxu0 0.0
    %1580 = vmatpush1.msra.mxu0 0.0
    %1581 = vmatprep.subr.mxu0 0.0
    %1582 = vmatpush1.msra.mxu0 0.0
    %1583 = vmatprep.subr.mxu0 0.0
    %1584 = vmatpush1.msra.mxu0 0.0
    %1585 = vmatprep.subr.mxu0 0.0
    %1586 = vmatpush1.msra.mxu0 0.0
    %1587 = vmatprep.subr.mxu0 0.0
    %1588 = vmatpush1.msra.mxu0 0.0
    %1589 = vmatprep.mubr.f32.mxu0 0.0
    %1590 = vmatmul.mubr.f32.gmra.mrb[0].mxu0 %v1520
    %v1591 = vpop.f32.mrb[0].mxu0
    %v1592 = vadd.f32 %v1518, %v1591
    %v1593 = vpop.f32.mrb[0].mxu0
    %1594 = vmatprep.mubr.f32.mxu0 0.0
    %1595 = vmatmul.mubr.f32.gmra.mrb[0].mxu0 %v1523
    %v1596 = vpop.f32.mrb[0].mxu0
    %v1597 = vadd.f32 %v1518, %v1596
    %v1598 = vpop.f32.mrb[0].mxu0
    %1599 = vdwg.mxu0
    %v1600 = vmax.f32 %v1592, 0.0
    %v1601 = vmax.f32 %v1597, 0.0
    %s1602 = scalar_lea.vmem %s4, 32
    %v1603 = vld [vmem:[%s1602] sm:$0xff]
    %v1604 = vld [vmem:[%s1602 + $0x8] sm:$0xff]
    %v1605 = vld [vmem:[%s1602 + $0x10] sm:$0xff]
    %v1606 = vld [vmem:[%s1602 + $0x18] sm:$0xff]
    %v1607 = vlaneseq
    %v1608 = vshrl.u32 %v1607, 7
    %v1609 = vsub.s32 0, %v1608
    %v1610 = vrot.slane %v82, %v1609
    %vm1611 = vcmask 523264
    %v1613 = vsel %vm1611, %v1600, 0
    %v1616 = vsel %vm1611, %v1601, 0
    %v1619 = vsel %vm1611, %v1603, 0
    %v1622 = vsel %vm1611, %v1604, 0
    %v1625 = vsel %vm1611, %v1605, 0
    %v1628 = vsel %vm1611, %v1606, 0
    %1630 = vmatprep.subr.mxu0 0.0
    %1631 = vmatpush1.xpose.msra.mxu0 %v1619
    %1632 = vmatprep.subr.mxu0 0.0
    %1633 = vmatpush1.xpose.msra.mxu0 %v1622
    %1634 = vmatprep.subr.mxu0 0.0
    %1635 = vmatpush1.xpose.msra.mxu0 %v1625
    %1636 = vmatprep.subr.mxu0 0.0
    %1637 = vmatpush1.xpose.msra.mxu0 %v1628
    %1638 = vmatprep.subr.mxu0 0.0
    %1639 = vmatpush1.xpose.msra.mxu0 0.0
    %1640 = vmatprep.subr.mxu0 0.0
    %1641 = vmatpush1.xpose.msra.mxu0 0.0
    %1642 = vmatprep.subr.mxu0 0.0
    %1643 = vmatpush1.xpose.msra.mxu0 0.0
    %1644 = vmatprep.subr.mxu0 0.0
    %1645 = vmatpush1.xpose.msra.mxu0 0.0
    %1646 = vmatprep.subr.mxu0 0.0
    %1647 = vmatpush1.xpose.msra.mxu0 0.0
    %1648 = vmatprep.subr.mxu0 0.0
    %1649 = vmatpush1.xpose.msra.mxu0 0.0
    %1650 = vmatprep.subr.mxu0 0.0
    %1651 = vmatpush1.xpose.msra.mxu0 0.0
    %1652 = vmatprep.subr.mxu0 0.0
    %1653 = vmatpush1.xpose.msra.mxu0 0.0
    %1654 = vmatprep.subr.mxu0 0.0
    %1655 = vmatpush1.xpose.msra.mxu0 0.0
    %1656 = vmatprep.subr.mxu0 0.0
    %1657 = vmatpush1.xpose.msra.mxu0 0.0
    %1658 = vmatprep.subr.mxu0 0.0
    %1659 = vmatpush1.xpose.msra.mxu0 0.0
    %1660 = vmatprep.subr.mxu0 0.0
    %1661 = vmatpush1.xpose.msra.mxu0 0.0
    %1662 = vmatprep.subr.mxu0 0.0
    %1663 = vmatpush1.xpose.msra.mxu0 0.0
    %1664 = vmatprep.subr.mxu0 0.0
    %1665 = vmatpush1.xpose.msra.mxu0 0.0
    %1666 = vmatprep.subr.mxu0 0.0
    %1667 = vmatpush1.xpose.msra.mxu0 0.0
    %1668 = vmatprep.subr.mxu0 0.0
    %1669 = vmatpush1.xpose.msra.mxu0 0.0
    %1670 = vmatprep.subr.mxu0 0.0
    %1671 = vmatpush1.xpose.msra.mxu0 0.0
    %1672 = vmatprep.subr.mxu0 0.0
    %1673 = vmatpush1.xpose.msra.mxu0 0.0
    %1674 = vmatprep.subr.mxu0 0.0
    %1675 = vmatpush1.xpose.msra.mxu0 0.0
    %1676 = vmatprep.subr.mxu0 0.0
    %1677 = vmatpush1.xpose.msra.mxu0 0.0
    %1678 = vmatprep.subr.mxu0 0.0
    %1679 = vmatpush1.xpose.msra.mxu0 0.0
    %1680 = vmatprep.subr.mxu0 0.0
    %1681 = vmatpush1.xpose.msra.mxu0 0.0
    %1682 = vmatprep.subr.mxu0 0.0
    %1683 = vmatpush1.xpose.msra.mxu0 0.0
    %1684 = vmatprep.subr.mxu0 0.0
    %1685 = vmatpush1.xpose.msra.mxu0 0.0
    %1686 = vmatprep.subr.mxu0 0.0
    %1687 = vmatpush1.xpose.msra.mxu0 0.0
    %1688 = vmatprep.subr.mxu0 0.0
    %1689 = vmatpush1.xpose.msra.mxu0 0.0
    %1690 = vmatprep.subr.mxu0 0.0
    %1691 = vmatpush1.xpose.msra.mxu0 0.0
    %1692 = vmatprep.subr.mxu0 0.0
    %1693 = vmatpush1.xpose.msra.mxu0 0.0
    %1694 = vmatprep.mubr.f32.mxu0 0.0
    %1695 = vmatmul.mubr.f32.gmra.mrb[0].mxu0 %v1613
    %v1696 = vpop.f32.mrb[0].mxu0
    %v1697 = vadd.f32 %v1610, %v1696
    %v1698 = vpop.f32.mrb[0].mxu0
    %1699 = vmatprep.mubr.f32.mxu0 0.0
    %1700 = vmatmul.mubr.f32.gmra.mrb[0].mxu0 %v1616
    %v1701 = vpop.f32.mrb[0].mxu0
    %v1702 = vadd.f32 %v1610, %v1701
    %v1703 = vpop.f32.mrb[0].mxu0
    %1704 = vdwg.mxu0
    %v1705 = vadd.f32 %v1509, %v1697
    %v1706 = vadd.f32 %v1510, %v1702
    %v1707 = vsel %vm94, %v1705, 0.0
    %1708 = vadd.xlane.f32.xlu0 %v1707
    %v1709 = vpop.xlane.xlu0 %1708
    %v1710 = vsel %vm94, %v1706, 0.0
    %1711 = vadd.xlane.f32.xlu0 %v1710
    %v1712 = vpop.xlane.xlu0 %1711
    %v1713 = vmul.f32 %v1709, %v1478
    %v1714 = vmul.f32 %v1712, %v1478
    %v1715 = vsub.f32 %v1705, %v1713
    %v1716 = vsub.f32 %v1706, %v1714
    %v1717 = vmul.f32 %v1715, %v1715
    %v1718 = vmul.f32 %v1716, %v1716
    %v1719 = vsel %vm94, %v1717, 0.0
    %1720 = vadd.xlane.f32.xlu0 %v1719
    %v1721 = vpop.xlane.xlu0 %1720
    %v1722 = vsel %vm94, %v1718, 0.0
    %1723 = vadd.xlane.f32.xlu0 %v1722
    %v1724 = vpop.xlane.xlu0 %1723
    %v1725 = vmul.f32 %v1721, %v1478
    %v1726 = vmul.f32 %v1724, %v1478
    %v1727 = vadd.f32 %v1725, 1e-05
    %v1728 = vadd.f32 %v1726, 1e-05
    %v1729 = vrsqrt.pop %v1727
    %v1730 = vrsqrt.pop %v1728
    %v1731 = vmul.f32 %v1715, %v1729
    %v1732 = vmul.f32 %v1716, %v1730
    %v1733 = vlaneseq
    %v1734 = vshrl.u32 %v1733, 7
    %v1735 = vsub.s32 0, %v1734
    %v1736 = vrot.slane %v83, %v1735
    %v1737 = vmul.f32 %v1731, %v1736
    %v1738 = vmul.f32 %v1732, %v1736
    %v1739 = vlaneseq
    %v1740 = vshrl.u32 %v1739, 7
    %v1741 = vsub.s32 0, %v1740
    %v1742 = vrot.slane %v84, %v1741
    %v1743 = vadd.f32 %v1737, %v1742
    %v1744 = vadd.f32 %v1738, %v1742
    %1745 = vst.msk [vmem:[#allocation7] sm:$0xff] %vm94, %v1743
    %1746 = vst.msk [vmem:[#allocation7 + $0x8] sm:$0xff] %vm94, %v1744
    // Predicated region
    $region34: #{tpu_custom_call.1} parent=1 // pred_check
      _
    $region35: #{tpu_custom_call.1} parent=1 // pred_check_branch
      %1748 = sbr.rel (0) target = $region37
    $region36: #{tpu_custom_call.1} parent=1 // pred_region
      %s1750 = ssub.s32 256, 256
      %1751 = vsyncadd [#allocation4], %s1750
      %s1752 = sshll.u32 [#allocation7], 4
      %s1753 = int_to_ptr.vmem [resolvable:$true] %s1752
      %1758 = dma.vmem_to_hbm [thread:$0]  %s1753, 256, %s6, [#allocation4], 128, 128, 8
    $region37: #{tpu_custom_call.1} parent=1 // pred_fallthru
      _
    // Predicated region
    $region38: #{tpu_custom_call.1} parent=1 // pred_check
      _
    $region39: #{tpu_custom_call.1} parent=1 // pred_check_branch
      %1760 = sbr.rel (0) target = $region41
    $region40: #{tpu_custom_call.1} parent=1 // pred_region
      %s1762 = ssub.s32 1024, 1024
      %1763 = vsyncadd [#allocation9], %s1762
      %s1764 = sshll.u32 [#allocation8], 4
      %s1765 = int_to_ptr.vmem [resolvable:$true] %s1764
      %1770 = dma.vmem_to_hbm [thread:$0]  %s1765, 1024, %s7, [#allocation9], 128, 128, 8
    $region41: #{tpu_custom_call.1} parent=1 // pred_fallthru
      _
    // Predicated region
    $region42: #{tpu_custom_call.1} parent=1 // pred_check
      _
    $region43: #{tpu_custom_call.1} parent=1 // pred_check_branch
      %1772 = sbr.rel (0) target = $region45
    $region44: #{tpu_custom_call.1} parent=1 // pred_region
      %1773 = dma.done [#allocation4], 256
    $region45: #{tpu_custom_call.1} parent=1 // pred_fallthru
      _
    // Predicated region
    $region46: #{tpu_custom_call.1} parent=1 // pred_check
      _
    $region47: #{tpu_custom_call.1} parent=1 // pred_check_branch
      %1775 = sbr.rel (0) target = $region49
    $region48: #{tpu_custom_call.1} parent=1 // pred_region
      %1776 = dma.done [#allocation9], 1024
    $region49: #{tpu_custom_call.1} parent=1 // pred_fallthru
      _
    %1777 = vsyncpa [#allocation3], 1
    %1778 = vsyncpa [#allocation6], 1
    %1779 = vsyncpa [#allocation4], 1
    %1780 = vsyncpa [#allocation9], 1

</llo_original>
